<compile_context>
chip_gen: v7x
topology: tpu7x:2x2x1
jax: 0.10.0
libtpu: 0.0.40
codegen_flags: <defaults>
</compile_context>

<pallas_src>
import functools

import jax
import jax.numpy as jnp
from jax.experimental import pallas as pl
from jax.experimental.pallas import tpu as pltpu

KS = 7      # kernel_size
PAD = 3     # padding for kernel_size=7
LANE = 128


def _round_up(v, m):
    return (v + m - 1) // m * m


def _scratch_geometry(H, W):
    HW = H * W
    maps_lm = _round_up(PAD * W, LANE)                       # left margin, lane-aligned
    maps_w = _round_up(maps_lm + HW + PAD * W, LANE)         # dy-shift staging width
    part_lm = LANE
    part_w = _round_up(part_lm + HW + PAD, LANE)             # dx-shift staging width
    return maps_lm, maps_w, part_lm, part_w


def _spatial_attention_kernel(H, W, maps_lm, part_lm,
                              w_ref, mask_ref, x_ref, o_ref, maps_pad, part_pad):
    # w_ref:    (2*KS*KS,) f32 in SMEM (conv weights, read as scalars)
    # mask_ref: (KS, H*W)  f32 horizontal border masks (1 per dx)
    # x_ref:    (C, H*W)   native dtype, lane-dense
    C, HW = x_ref.shape
    maps_w = maps_pad.shape[1]
    part_w = part_pad.shape[1]

    # ---- channel reduction (lane-dense; f32 accumulation, max stays native) ----
    x_nat = x_ref[...]
    mean_flat = jnp.sum(x_nat, axis=0, keepdims=True, dtype=jnp.float32) / C   # (1, HW)
    max_flat = jnp.max(x_nat, axis=0, keepdims=True)                           # (1, HW)

    # ---- zero only the margins (interior is written exactly once, lane-aligned).
    # Re-done every grid step: with "parallel" semantics each core has its own
    # scratch and may never execute step 0.
    maps_pad[:, 0:maps_lm] = jnp.zeros((2, maps_lm), jnp.float32)
    if maps_w - maps_lm - HW > 0:
        maps_pad[:, maps_lm + HW:] = jnp.zeros((2, maps_w - maps_lm - HW), jnp.float32)
    part_pad[:, 0:part_lm] = jnp.zeros((1, part_lm), jnp.float32)
    if part_w - part_lm - HW > 0:
        part_pad[:, part_lm + HW:] = jnp.zeros((1, part_w - part_lm - HW), jnp.float32)

    maps_pad[0:1, maps_lm:maps_lm + HW] = mean_flat
    maps_pad[1:2, maps_lm:maps_lm + HW] = max_flat.astype(jnp.float32)

    # ---- 14 row(dy)-shifted copies; zero margins provide the vertical padding ----
    copies = []
    for c in range(2):
        per_c = []
        for dy in range(KS):
            off = maps_lm + (dy - PAD) * W
            per_c.append(maps_pad[c:c + 1, off:off + HW])      # (1, HW) f32
        copies.append(per_c)

    # ---- 7x7 conv: 98 scalar mul-adds on the VPU + 7 staged lane shifts ----
    acc = jnp.zeros((1, HW), jnp.float32)
    for dx in range(KS):
        part = jnp.zeros((1, HW), jnp.float32)
        for c in range(2):
            for dy in range(KS):
                wv = w_ref[c * KS * KS + dy * KS + dx]         # scalar from SMEM
                part = part + copies[c][dy] * wv
        d = dx - PAD
        # horizontal shift by d through the zero-margined staging row
        part_pad[0:1, part_lm:part_lm + HW] = part             # lane-aligned store
        shifted = part_pad[0:1, part_lm + d:part_lm + d + HW]  # (1, HW)
        acc = acc + shifted * mask_ref[dx:dx + 1, :]           # mask the row wrap

    attn = jax.nn.sigmoid(acc)                                  # (1, HW) f32

    # ---- apply attention straight from the ref; lane-dense, unmasked store ----
    o_ref[...] = (x_ref[...] * attn.astype(o_ref.dtype)).astype(o_ref.dtype)


def spatial_attention(x, weight):
    """x: (N, C, H, W); weight: (1, 2, KS, KS) conv weight (no bias)."""
    N, C, H, W = x.shape
    HW = H * W
    maps_lm, maps_w, part_lm, part_w = _scratch_geometry(H, W)

    x_flat = x.reshape(N, C, HW)                                # lane-dense layout
    w_flat = weight.reshape(-1).astype(jnp.float32)             # (2*KS*KS,)

    # Horizontal (column) border masks, one per dx tap: mask[dx, p] = 1 iff the
    # source column (p % W) + dx - PAD is inside [0, W).
    col = jnp.arange(HW, dtype=jnp.int32) % W
    border_mask = jnp.stack(
        [((col + (dx - PAD) >= 0) & (col + (dx - PAD) < W)).astype(jnp.float32)
         for dx in range(KS)], axis=0)                          # (KS, HW)

    kernel = functools.partial(_spatial_attention_kernel, H, W, maps_lm, part_lm)

    out_flat = pl.pallas_call(
        kernel,
        out_shape=jax.ShapeDtypeStruct((N, C, HW), x.dtype),
        grid_spec=pltpu.PrefetchScalarGridSpec(
            num_scalar_prefetch=0,
            grid=(N,),
            in_specs=[
                pl.BlockSpec(memory_space=pltpu.MemorySpace.SMEM),   # conv weights
                pl.BlockSpec((KS, HW), lambda n: (0, 0)),            # border masks
                pl.BlockSpec((None, C, HW), lambda n: (n, 0, 0)),    # x (lane-dense)
            ],
            out_specs=pl.BlockSpec((None, C, HW), lambda n: (n, 0, 0)),
            scratch_shapes=[
                pltpu.VMEM((2, maps_w), jnp.float32),   # mean/max maps + margins
                pltpu.VMEM((1, part_w), jnp.float32),   # dx-shift staging row
            ],
        ),
        compiler_params=pltpu.CompilerParams(
            dimension_semantics=("parallel",)),          # batch splits across v7x cores
    )(w_flat, border_mask, x_flat)

    return out_flat.reshape(N, C, H, W)


def reference(x, weight):
    """Pure-JAX reference matching the PyTorch forward."""
    mean_map = jnp.mean(x, axis=1, keepdims=True)
    max_map = jnp.max(x, axis=1, keepdims=True)
    cat = jnp.concatenate([mean_map, max_map], axis=1)           # (N, 2, H, W)
    conv = jax.lax.conv_general_dilated(
        cat.astype(jnp.float32), weight.astype(jnp.float32),
        window_strides=(1, 1), padding=((PAD, PAD), (PAD, PAD)),
        dimension_numbers=("NCHW", "OIHW", "NCHW"))
    return x * jax.nn.sigmoid(conv)


if __name__ == "__main__":
    key = jax.random.PRNGKey(0)
    kx, kw = jax.random.split(key)

    # Small shapes consistent with the module: N=2, C=4, H=W=16
    x = jax.random.normal(kx, (2, 4, 16, 16), dtype=jnp.float32)

    # Deterministic Conv2d(2, 1, 7, bias=False) weight (kaiming-uniform-like bound)
    fan_in = 2 * KS * KS
    bound = 1.0 / (fan_in ** 0.5)
    weight = jax.random.uniform(kw, (1, 2, KS, KS), jnp.float32, -bound, bound)

    out = spatial_attention(x, weight)
    jax.block_until_ready(out)

    ref = reference(x, weight)
    err = float(jnp.max(jnp.abs(out - ref)))
    assert jnp.allclose(out, ref, atol=1e-5, rtol=1e-5), f"max abs err = {err}"
    print("KERNEL_OK")
</pallas_src>

<mosaic_0001>
module attributes {stable_mosaic.version = 11 : i64} {
  func.func @_spatial_attention_kernel(%arg0: i32, %arg1: memref<98xf32, #tpu.memory_space<smem>>, %arg2: memref<7x256xf32, #tpu.memory_space<vmem>>, %arg3: memref<1x4x256xf32, #tpu.memory_space<vmem>>, %arg4: memref<1x4x256xf32, #tpu.memory_space<vmem>>, %arg5: memref<2x512xf32, #tpu.memory_space<vmem>>, %arg6: memref<1x512xf32, #tpu.memory_space<vmem>>) attributes {dimension_semantics = [#tpu.dimension_semantics<parallel>], iteration_bounds = array<i64: 2>, scalar_prefetch = 0 : i64, scratch_operands = 2 : i64, tpu.core_type = #tpu.core_type<tc>, window_params = [{transform_indices = @transform_0, window_bounds = array<i64: 98>}, {pipeline_mode = #tpu.pipeline_mode<synchronous>, transform_indices = @transform_1, window_bounds = array<i64: 7, 256>}, {transform_indices = @transform_2, window_bounds = array<i64: 1, 4, 256>}, {transform_indices = @transform_3, window_bounds = array<i64: 1, 4, 256>}]} {
    %c0 = arith.constant 0 : index
    %c0_0 = arith.constant 0 : index
    %c0_1 = arith.constant 0 : index
    %0 = vector.load %arg3[%c0, %c0_0, %c0_1] : memref<1x4x256xf32, #tpu.memory_space<vmem>>, vector<1x4x256xf32>
    %1 = vector.shape_cast %0 : vector<1x4x256xf32> to vector<4x256xf32>
    %cst = arith.constant dense<0.000000e+00> : vector<256xf32>
    %2 = vector.multi_reduction <add>, %1, %cst [0] : vector<4x256xf32> to vector<256xf32>
    %3 = vector.shape_cast %2 : vector<256xf32> to vector<1x256xf32>
    %cst_2 = arith.constant 4.000000e+00 : f32
    %4 = vector.broadcast %cst_2 : f32 to vector<1x256xf32>
    %5 = arith.divf %3, %4 : vector<1x256xf32>
    %cst_3 = arith.constant dense<0xFF800000> : vector<256xf32>
    %6 = vector.multi_reduction <maximumf>, %1, %cst_3 [0] : vector<4x256xf32> to vector<256xf32>
    %7 = vector.shape_cast %6 : vector<256xf32> to vector<1x256xf32>
    %cst_4 = arith.constant 0.000000e+00 : f32
    %8 = vector.broadcast %cst_4 : f32 to vector<2x128xf32>
    %c0_5 = arith.constant 0 : index
    %c0_6 = arith.constant 0 : index
    %9 = vector.load %arg5[%c0_5, %c0_6] : memref<2x512xf32, #tpu.memory_space<vmem>>, vector<2x128xf32>
    tpu.vector_store %arg5[%c0_5, %c0_6], %8 {strides = array<i32>} : memref<2x512xf32, #tpu.memory_space<vmem>>, vector<2x128xf32>,
    %cst_7 = arith.constant 0.000000e+00 : f32
    %10 = vector.broadcast %cst_7 : f32 to vector<2x128xf32>
    %c0_8 = arith.constant 0 : index
    %c384 = arith.constant 384 : index
    %11 = vector.load %arg5[%c0_8, %c384] : memref<2x512xf32, #tpu.memory_space<vmem>>, vector<2x128xf32>
    tpu.vector_store %arg5[%c0_8, %c384], %10 {strides = array<i32>} : memref<2x512xf32, #tpu.memory_space<vmem>>, vector<2x128xf32>,
    %cst_9 = arith.constant 0.000000e+00 : f32
    %12 = vector.broadcast %cst_9 : f32 to vector<1x128xf32>
    %c0_10 = arith.constant 0 : index
    %c0_11 = arith.constant 0 : index
    %13 = vector.load %arg6[%c0_10, %c0_11] : memref<1x512xf32, #tpu.memory_space<vmem>>, vector<1x128xf32>
    tpu.vector_store %arg6[%c0_10, %c0_11], %12 {strides = array<i32>} : memref<1x512xf32, #tpu.memory_space<vmem>>, vector<1x128xf32>,
    %cst_12 = arith.constant 0.000000e+00 : f32
    %14 = vector.broadcast %cst_12 : f32 to vector<1x128xf32>
    %c0_13 = arith.constant 0 : index
    %c384_14 = arith.constant 384 : index
    %15 = vector.load %arg6[%c0_13, %c384_14] : memref<1x512xf32, #tpu.memory_space<vmem>>, vector<1x128xf32>
    tpu.vector_store %arg6[%c0_13, %c384_14], %14 {strides = array<i32>} : memref<1x512xf32, #tpu.memory_space<vmem>>, vector<1x128xf32>,
    %c0_15 = arith.constant 0 : index
    %c128 = arith.constant 128 : index
    %16 = vector.load %arg5[%c0_15, %c128] : memref<2x512xf32, #tpu.memory_space<vmem>>, vector<1x256xf32>
    tpu.vector_store %arg5[%c0_15, %c128], %5 {strides = array<i32>} : memref<2x512xf32, #tpu.memory_space<vmem>>, vector<1x256xf32>,
    %c1 = arith.constant 1 : index
    %c128_16 = arith.constant 128 : index
    %17 = vector.load %arg5[%c1, %c128_16] : memref<2x512xf32, #tpu.memory_space<vmem>>, vector<1x256xf32>
    tpu.vector_store %arg5[%c1, %c128_16], %7 {strides = array<i32>} : memref<2x512xf32, #tpu.memory_space<vmem>>, vector<1x256xf32>,
    %c0_17 = arith.constant 0 : index
    %c80 = arith.constant 80 : index
    %18 = vector.load %arg5[%c0_17, %c80] : memref<2x512xf32, #tpu.memory_space<vmem>>, vector<1x256xf32>
    %c0_18 = arith.constant 0 : index
    %c96 = arith.constant 96 : index
    %19 = vector.load %arg5[%c0_18, %c96] : memref<2x512xf32, #tpu.memory_space<vmem>>, vector<1x256xf32>
    %c0_19 = arith.constant 0 : index
    %c112 = arith.constant 112 : index
    %20 = vector.load %arg5[%c0_19, %c112] : memref<2x512xf32, #tpu.memory_space<vmem>>, vector<1x256xf32>
    %c0_20 = arith.constant 0 : index
    %c128_21 = arith.constant 128 : index
    %21 = vector.load %arg5[%c0_20, %c128_21] : memref<2x512xf32, #tpu.memory_space<vmem>>, vector<1x256xf32>
    %c0_22 = arith.constant 0 : index
    %c144 = arith.constant 144 : index
    %22 = vector.load %arg5[%c0_22, %c144] : memref<2x512xf32, #tpu.memory_space<vmem>>, vector<1x256xf32>
    %c0_23 = arith.constant 0 : index
    %c160 = arith.constant 160 : index
    %23 = vector.load %arg5[%c0_23, %c160] : memref<2x512xf32, #tpu.memory_space<vmem>>, vector<1x256xf32>
    %c0_24 = arith.constant 0 : index
    %c176 = arith.constant 176 : index
    %24 = vector.load %arg5[%c0_24, %c176] : memref<2x512xf32, #tpu.memory_space<vmem>>, vector<1x256xf32>
    %c1_25 = arith.constant 1 : index
    %c80_26 = arith.constant 80 : index
    %25 = vector.load %arg5[%c1_25, %c80_26] : memref<2x512xf32, #tpu.memory_space<vmem>>, vector<1x256xf32>
    %c1_27 = arith.constant 1 : index
    %c96_28 = arith.constant 96 : index
    %26 = vector.load %arg5[%c1_27, %c96_28] : memref<2x512xf32, #tpu.memory_space<vmem>>, vector<1x256xf32>
    %c1_29 = arith.constant 1 : index
    %c112_30 = arith.constant 112 : index
    %27 = vector.load %arg5[%c1_29, %c112_30] : memref<2x512xf32, #tpu.memory_space<vmem>>, vector<1x256xf32>
    %c1_31 = arith.constant 1 : index
    %c128_32 = arith.constant 128 : index
    %28 = vector.load %arg5[%c1_31, %c128_32] : memref<2x512xf32, #tpu.memory_space<vmem>>, vector<1x256xf32>
    %c1_33 = arith.constant 1 : index
    %c144_34 = arith.constant 144 : index
    %29 = vector.load %arg5[%c1_33, %c144_34] : memref<2x512xf32, #tpu.memory_space<vmem>>, vector<1x256xf32>
    %c1_35 = arith.constant 1 : index
    %c160_36 = arith.constant 160 : index
    %30 = vector.load %arg5[%c1_35, %c160_36] : memref<2x512xf32, #tpu.memory_space<vmem>>, vector<1x256xf32>
    %c1_37 = arith.constant 1 : index
    %c176_38 = arith.constant 176 : index
    %31 = vector.load %arg5[%c1_37, %c176_38] : memref<2x512xf32, #tpu.memory_space<vmem>>, vector<1x256xf32>
    %cst_39 = arith.constant 0.000000e+00 : f32
    %32 = vector.broadcast %cst_39 : f32 to vector<1x256xf32>
    %cst_40 = arith.constant 0.000000e+00 : f32
    %33 = vector.broadcast %cst_40 : f32 to vector<1x256xf32>
    %c0_41 = arith.constant 0 : index
    %34 = memref.load %arg1[%c0_41] : memref<98xf32, #tpu.memory_space<smem>>
    %35 = vector.broadcast %34 : f32 to vector<1x256xf32>
    %36 = arith.mulf %18, %35 : vector<1x256xf32>
    %37 = arith.addf %33, %36 : vector<1x256xf32>
    %c7 = arith.constant 7 : index
    %38 = memref.load %arg1[%c7] : memref<98xf32, #tpu.memory_space<smem>>
    %39 = vector.broadcast %38 : f32 to vector<1x256xf32>
    %40 = arith.mulf %19, %39 : vector<1x256xf32>
    %41 = arith.addf %37, %40 : vector<1x256xf32>
    %c14 = arith.constant 14 : index
    %42 = memref.load %arg1[%c14] : memref<98xf32, #tpu.memory_space<smem>>
    %43 = vector.broadcast %42 : f32 to vector<1x256xf32>
    %44 = arith.mulf %20, %43 : vector<1x256xf32>
    %45 = arith.addf %41, %44 : vector<1x256xf32>
    %c21 = arith.constant 21 : index
    %46 = memref.load %arg1[%c21] : memref<98xf32, #tpu.memory_space<smem>>
    %47 = vector.broadcast %46 : f32 to vector<1x256xf32>
    %48 = arith.mulf %21, %47 : vector<1x256xf32>
    %49 = arith.addf %45, %48 : vector<1x256xf32>
    %c28 = arith.constant 28 : index
    %50 = memref.load %arg1[%c28] : memref<98xf32, #tpu.memory_space<smem>>
    %51 = vector.broadcast %50 : f32 to vector<1x256xf32>
    %52 = arith.mulf %22, %51 : vector<1x256xf32>
    %53 = arith.addf %49, %52 : vector<1x256xf32>
    %c35 = arith.constant 35 : index
    %54 = memref.load %arg1[%c35] : memref<98xf32, #tpu.memory_space<smem>>
    %55 = vector.broadcast %54 : f32 to vector<1x256xf32>
    %56 = arith.mulf %23, %55 : vector<1x256xf32>
    %57 = arith.addf %53, %56 : vector<1x256xf32>
    %c42 = arith.constant 42 : index
    %58 = memref.load %arg1[%c42] : memref<98xf32, #tpu.memory_space<smem>>
    %59 = vector.broadcast %58 : f32 to vector<1x256xf32>
    %60 = arith.mulf %24, %59 : vector<1x256xf32>
    %61 = arith.addf %57, %60 : vector<1x256xf32>
    %c49 = arith.constant 49 : index
    %62 = memref.load %arg1[%c49] : memref<98xf32, #tpu.memory_space<smem>>
    %63 = vector.broadcast %62 : f32 to vector<1x256xf32>
    %64 = arith.mulf %25, %63 : vector<1x256xf32>
    %65 = arith.addf %61, %64 : vector<1x256xf32>
    %c56 = arith.constant 56 : index
    %66 = memref.load %arg1[%c56] : memref<98xf32, #tpu.memory_space<smem>>
    %67 = vector.broadcast %66 : f32 to vector<1x256xf32>
    %68 = arith.mulf %26, %67 : vector<1x256xf32>
    %69 = arith.addf %65, %68 : vector<1x256xf32>
    %c63 = arith.constant 63 : index
    %70 = memref.load %arg1[%c63] : memref<98xf32, #tpu.memory_space<smem>>
    %71 = vector.broadcast %70 : f32 to vector<1x256xf32>
    %72 = arith.mulf %27, %71 : vector<1x256xf32>
    %73 = arith.addf %69, %72 : vector<1x256xf32>
    %c70 = arith.constant 70 : index
    %74 = memref.load %arg1[%c70] : memref<98xf32, #tpu.memory_space<smem>>
    %75 = vector.broadcast %74 : f32 to vector<1x256xf32>
    %76 = arith.mulf %28, %75 : vector<1x256xf32>
    %77 = arith.addf %73, %76 : vector<1x256xf32>
    %c77 = arith.constant 77 : index
    %78 = memref.load %arg1[%c77] : memref<98xf32, #tpu.memory_space<smem>>
    %79 = vector.broadcast %78 : f32 to vector<1x256xf32>
    %80 = arith.mulf %29, %79 : vector<1x256xf32>
    %81 = arith.addf %77, %80 : vector<1x256xf32>
    %c84 = arith.constant 84 : index
    %82 = memref.load %arg1[%c84] : memref<98xf32, #tpu.memory_space<smem>>
    %83 = vector.broadcast %82 : f32 to vector<1x256xf32>
    %84 = arith.mulf %30, %83 : vector<1x256xf32>
    %85 = arith.addf %81, %84 : vector<1x256xf32>
    %c91 = arith.constant 91 : index
    %86 = memref.load %arg1[%c91] : memref<98xf32, #tpu.memory_space<smem>>
    %87 = vector.broadcast %86 : f32 to vector<1x256xf32>
    %88 = arith.mulf %31, %87 : vector<1x256xf32>
    %89 = arith.addf %85, %88 : vector<1x256xf32>
    %c0_42 = arith.constant 0 : index
    %c128_43 = arith.constant 128 : index
    %90 = vector.load %arg6[%c0_42, %c128_43] : memref<1x512xf32, #tpu.memory_space<vmem>>, vector<1x256xf32>
    tpu.vector_store %arg6[%c0_42, %c128_43], %89 {strides = array<i32>} : memref<1x512xf32, #tpu.memory_space<vmem>>, vector<1x256xf32>,
    %c0_44 = arith.constant 0 : index
    %c125 = arith.constant 125 : index
    %91 = vector.load %arg6[%c0_44, %c125] : memref<1x512xf32, #tpu.memory_space<vmem>>, vector<1x256xf32>
    %c0_45 = arith.constant 0 : index
    %c0_46 = arith.constant 0 : index
    %92 = vector.load %arg2[%c0_45, %c0_46] : memref<7x256xf32, #tpu.memory_space<vmem>>, vector<1x256xf32>
    %93 = arith.mulf %91, %92 : vector<1x256xf32>
    %94 = arith.addf %32, %93 : vector<1x256xf32>
    %cst_47 = arith.constant 0.000000e+00 : f32
    %95 = vector.broadcast %cst_47 : f32 to vector<1x256xf32>
    %c1_48 = arith.constant 1 : index
    %96 = memref.load %arg1[%c1_48] : memref<98xf32, #tpu.memory_space<smem>>
    %97 = vector.broadcast %96 : f32 to vector<1x256xf32>
    %98 = arith.mulf %18, %97 : vector<1x256xf32>
    %99 = arith.addf %95, %98 : vector<1x256xf32>
    %c8 = arith.constant 8 : index
    %100 = memref.load %arg1[%c8] : memref<98xf32, #tpu.memory_space<smem>>
    %101 = vector.broadcast %100 : f32 to vector<1x256xf32>
    %102 = arith.mulf %19, %101 : vector<1x256xf32>
    %103 = arith.addf %99, %102 : vector<1x256xf32>
    %c15 = arith.constant 15 : index
    %104 = memref.load %arg1[%c15] : memref<98xf32, #tpu.memory_space<smem>>
    %105 = vector.broadcast %104 : f32 to vector<1x256xf32>
    %106 = arith.mulf %20, %105 : vector<1x256xf32>
    %107 = arith.addf %103, %106 : vector<1x256xf32>
    %c22 = arith.constant 22 : index
    %108 = memref.load %arg1[%c22] : memref<98xf32, #tpu.memory_space<smem>>
    %109 = vector.broadcast %108 : f32 to vector<1x256xf32>
    %110 = arith.mulf %21, %109 : vector<1x256xf32>
    %111 = arith.addf %107, %110 : vector<1x256xf32>
    %c29 = arith.constant 29 : index
    %112 = memref.load %arg1[%c29] : memref<98xf32, #tpu.memory_space<smem>>
    %113 = vector.broadcast %112 : f32 to vector<1x256xf32>
    %114 = arith.mulf %22, %113 : vector<1x256xf32>
    %115 = arith.addf %111, %114 : vector<1x256xf32>
    %c36 = arith.constant 36 : index
    %116 = memref.load %arg1[%c36] : memref<98xf32, #tpu.memory_space<smem>>
    %117 = vector.broadcast %116 : f32 to vector<1x256xf32>
    %118 = arith.mulf %23, %117 : vector<1x256xf32>
    %119 = arith.addf %115, %118 : vector<1x256xf32>
    %c43 = arith.constant 43 : index
    %120 = memref.load %arg1[%c43] : memref<98xf32, #tpu.memory_space<smem>>
    %121 = vector.broadcast %120 : f32 to vector<1x256xf32>
    %122 = arith.mulf %24, %121 : vector<1x256xf32>
    %123 = arith.addf %119, %122 : vector<1x256xf32>
    %c50 = arith.constant 50 : index
    %124 = memref.load %arg1[%c50] : memref<98xf32, #tpu.memory_space<smem>>
    %125 = vector.broadcast %124 : f32 to vector<1x256xf32>
    %126 = arith.mulf %25, %125 : vector<1x256xf32>
    %127 = arith.addf %123, %126 : vector<1x256xf32>
    %c57 = arith.constant 57 : index
    %128 = memref.load %arg1[%c57] : memref<98xf32, #tpu.memory_space<smem>>
    %129 = vector.broadcast %128 : f32 to vector<1x256xf32>
    %130 = arith.mulf %26, %129 : vector<1x256xf32>
    %131 = arith.addf %127, %130 : vector<1x256xf32>
    %c64 = arith.constant 64 : index
    %132 = memref.load %arg1[%c64] : memref<98xf32, #tpu.memory_space<smem>>
    %133 = vector.broadcast %132 : f32 to vector<1x256xf32>
    %134 = arith.mulf %27, %133 : vector<1x256xf32>
    %135 = arith.addf %131, %134 : vector<1x256xf32>
    %c71 = arith.constant 71 : index
    %136 = memref.load %arg1[%c71] : memref<98xf32, #tpu.memory_space<smem>>
    %137 = vector.broadcast %136 : f32 to vector<1x256xf32>
    %138 = arith.mulf %28, %137 : vector<1x256xf32>
    %139 = arith.addf %135, %138 : vector<1x256xf32>
    %c78 = arith.constant 78 : index
    %140 = memref.load %arg1[%c78] : memref<98xf32, #tpu.memory_space<smem>>
    %141 = vector.broadcast %140 : f32 to vector<1x256xf32>
    %142 = arith.mulf %29, %141 : vector<1x256xf32>
    %143 = arith.addf %139, %142 : vector<1x256xf32>
    %c85 = arith.constant 85 : index
    %144 = memref.load %arg1[%c85] : memref<98xf32, #tpu.memory_space<smem>>
    %145 = vector.broadcast %144 : f32 to vector<1x256xf32>
    %146 = arith.mulf %30, %145 : vector<1x256xf32>
    %147 = arith.addf %143, %146 : vector<1x256xf32>
    %c92 = arith.constant 92 : index
    %148 = memref.load %arg1[%c92] : memref<98xf32, #tpu.memory_space<smem>>
    %149 = vector.broadcast %148 : f32 to vector<1x256xf32>
    %150 = arith.mulf %31, %149 : vector<1x256xf32>
    %151 = arith.addf %147, %150 : vector<1x256xf32>
    %c0_49 = arith.constant 0 : index
    %c128_50 = arith.constant 128 : index
    %152 = vector.load %arg6[%c0_49, %c128_50] : memref<1x512xf32, #tpu.memory_space<vmem>>, vector<1x256xf32>
    tpu.vector_store %arg6[%c0_49, %c128_50], %151 {strides = array<i32>} : memref<1x512xf32, #tpu.memory_space<vmem>>, vector<1x256xf32>,
    %c0_51 = arith.constant 0 : index
    %c126 = arith.constant 126 : index
    %153 = vector.load %arg6[%c0_51, %c126] : memref<1x512xf32, #tpu.memory_space<vmem>>, vector<1x256xf32>
    %c1_52 = arith.constant 1 : index
    %c0_53 = arith.constant 0 : index
    %154 = vector.load %arg2[%c1_52, %c0_53] : memref<7x256xf32, #tpu.memory_space<vmem>>, vector<1x256xf32>
    %155 = arith.mulf %153, %154 : vector<1x256xf32>
    %156 = arith.addf %94, %155 : vector<1x256xf32>
    %cst_54 = arith.constant 0.000000e+00 : f32
    %157 = vector.broadcast %cst_54 : f32 to vector<1x256xf32>
    %c2 = arith.constant 2 : index
    %158 = memref.load %arg1[%c2] : memref<98xf32, #tpu.memory_space<smem>>
    %159 = vector.broadcast %158 : f32 to vector<1x256xf32>
    %160 = arith.mulf %18, %159 : vector<1x256xf32>
    %161 = arith.addf %157, %160 : vector<1x256xf32>
    %c9 = arith.constant 9 : index
    %162 = memref.load %arg1[%c9] : memref<98xf32, #tpu.memory_space<smem>>
    %163 = vector.broadcast %162 : f32 to vector<1x256xf32>
    %164 = arith.mulf %19, %163 : vector<1x256xf32>
    %165 = arith.addf %161, %164 : vector<1x256xf32>
    %c16 = arith.constant 16 : index
    %166 = memref.load %arg1[%c16] : memref<98xf32, #tpu.memory_space<smem>>
    %167 = vector.broadcast %166 : f32 to vector<1x256xf32>
    %168 = arith.mulf %20, %167 : vector<1x256xf32>
    %169 = arith.addf %165, %168 : vector<1x256xf32>
    %c23 = arith.constant 23 : index
    %170 = memref.load %arg1[%c23] : memref<98xf32, #tpu.memory_space<smem>>
    %171 = vector.broadcast %170 : f32 to vector<1x256xf32>
    %172 = arith.mulf %21, %171 : vector<1x256xf32>
    %173 = arith.addf %169, %172 : vector<1x256xf32>
    %c30 = arith.constant 30 : index
    %174 = memref.load %arg1[%c30] : memref<98xf32, #tpu.memory_space<smem>>
    %175 = vector.broadcast %174 : f32 to vector<1x256xf32>
    %176 = arith.mulf %22, %175 : vector<1x256xf32>
    %177 = arith.addf %173, %176 : vector<1x256xf32>
    %c37 = arith.constant 37 : index
    %178 = memref.load %arg1[%c37] : memref<98xf32, #tpu.memory_space<smem>>
    %179 = vector.broadcast %178 : f32 to vector<1x256xf32>
    %180 = arith.mulf %23, %179 : vector<1x256xf32>
    %181 = arith.addf %177, %180 : vector<1x256xf32>
    %c44 = arith.constant 44 : index
    %182 = memref.load %arg1[%c44] : memref<98xf32, #tpu.memory_space<smem>>
    %183 = vector.broadcast %182 : f32 to vector<1x256xf32>
    %184 = arith.mulf %24, %183 : vector<1x256xf32>
    %185 = arith.addf %181, %184 : vector<1x256xf32>
    %c51 = arith.constant 51 : index
    %186 = memref.load %arg1[%c51] : memref<98xf32, #tpu.memory_space<smem>>
    %187 = vector.broadcast %186 : f32 to vector<1x256xf32>
    %188 = arith.mulf %25, %187 : vector<1x256xf32>
    %189 = arith.addf %185, %188 : vector<1x256xf32>
    %c58 = arith.constant 58 : index
    %190 = memref.load %arg1[%c58] : memref<98xf32, #tpu.memory_space<smem>>
    %191 = vector.broadcast %190 : f32 to vector<1x256xf32>
    %192 = arith.mulf %26, %191 : vector<1x256xf32>
    %193 = arith.addf %189, %192 : vector<1x256xf32>
    %c65 = arith.constant 65 : index
    %194 = memref.load %arg1[%c65] : memref<98xf32, #tpu.memory_space<smem>>
    %195 = vector.broadcast %194 : f32 to vector<1x256xf32>
    %196 = arith.mulf %27, %195 : vector<1x256xf32>
    %197 = arith.addf %193, %196 : vector<1x256xf32>
    %c72 = arith.constant 72 : index
    %198 = memref.load %arg1[%c72] : memref<98xf32, #tpu.memory_space<smem>>
    %199 = vector.broadcast %198 : f32 to vector<1x256xf32>
    %200 = arith.mulf %28, %199 : vector<1x256xf32>
    %201 = arith.addf %197, %200 : vector<1x256xf32>
    %c79 = arith.constant 79 : index
    %202 = memref.load %arg1[%c79] : memref<98xf32, #tpu.memory_space<smem>>
    %203 = vector.broadcast %202 : f32 to vector<1x256xf32>
    %204 = arith.mulf %29, %203 : vector<1x256xf32>
    %205 = arith.addf %201, %204 : vector<1x256xf32>
    %c86 = arith.constant 86 : index
    %206 = memref.load %arg1[%c86] : memref<98xf32, #tpu.memory_space<smem>>
    %207 = vector.broadcast %206 : f32 to vector<1x256xf32>
    %208 = arith.mulf %30, %207 : vector<1x256xf32>
    %209 = arith.addf %205, %208 : vector<1x256xf32>
    %c93 = arith.constant 93 : index
    %210 = memref.load %arg1[%c93] : memref<98xf32, #tpu.memory_space<smem>>
    %211 = vector.broadcast %210 : f32 to vector<1x256xf32>
    %212 = arith.mulf %31, %211 : vector<1x256xf32>
    %213 = arith.addf %209, %212 : vector<1x256xf32>
    %c0_55 = arith.constant 0 : index
    %c128_56 = arith.constant 128 : index
    %214 = vector.load %arg6[%c0_55, %c128_56] : memref<1x512xf32, #tpu.memory_space<vmem>>, vector<1x256xf32>
    tpu.vector_store %arg6[%c0_55, %c128_56], %213 {strides = array<i32>} : memref<1x512xf32, #tpu.memory_space<vmem>>, vector<1x256xf32>,
    %c0_57 = arith.constant 0 : index
    %c127 = arith.constant 127 : index
    %215 = vector.load %arg6[%c0_57, %c127] : memref<1x512xf32, #tpu.memory_space<vmem>>, vector<1x256xf32>
    %c2_58 = arith.constant 2 : index
    %c0_59 = arith.constant 0 : index
    %216 = vector.load %arg2[%c2_58, %c0_59] : memref<7x256xf32, #tpu.memory_space<vmem>>, vector<1x256xf32>
    %217 = arith.mulf %215, %216 : vector<1x256xf32>
    %218 = arith.addf %156, %217 : vector<1x256xf32>
    %cst_60 = arith.constant 0.000000e+00 : f32
    %219 = vector.broadcast %cst_60 : f32 to vector<1x256xf32>
    %c3 = arith.constant 3 : index
    %220 = memref.load %arg1[%c3] : memref<98xf32, #tpu.memory_space<smem>>
    %221 = vector.broadcast %220 : f32 to vector<1x256xf32>
    %222 = arith.mulf %18, %221 : vector<1x256xf32>
    %223 = arith.addf %219, %222 : vector<1x256xf32>
    %c10 = arith.constant 10 : index
    %224 = memref.load %arg1[%c10] : memref<98xf32, #tpu.memory_space<smem>>
    %225 = vector.broadcast %224 : f32 to vector<1x256xf32>
    %226 = arith.mulf %19, %225 : vector<1x256xf32>
    %227 = arith.addf %223, %226 : vector<1x256xf32>
    %c17 = arith.constant 17 : index
    %228 = memref.load %arg1[%c17] : memref<98xf32, #tpu.memory_space<smem>>
    %229 = vector.broadcast %228 : f32 to vector<1x256xf32>
    %230 = arith.mulf %20, %229 : vector<1x256xf32>
    %231 = arith.addf %227, %230 : vector<1x256xf32>
    %c24 = arith.constant 24 : index
    %232 = memref.load %arg1[%c24] : memref<98xf32, #tpu.memory_space<smem>>
    %233 = vector.broadcast %232 : f32 to vector<1x256xf32>
    %234 = arith.mulf %21, %233 : vector<1x256xf32>
    %235 = arith.addf %231, %234 : vector<1x256xf32>
    %c31 = arith.constant 31 : index
    %236 = memref.load %arg1[%c31] : memref<98xf32, #tpu.memory_space<smem>>
    %237 = vector.broadcast %236 : f32 to vector<1x256xf32>
    %238 = arith.mulf %22, %237 : vector<1x256xf32>
    %239 = arith.addf %235, %238 : vector<1x256xf32>
    %c38 = arith.constant 38 : index
    %240 = memref.load %arg1[%c38] : memref<98xf32, #tpu.memory_space<smem>>
    %241 = vector.broadcast %240 : f32 to vector<1x256xf32>
    %242 = arith.mulf %23, %241 : vector<1x256xf32>
    %243 = arith.addf %239, %242 : vector<1x256xf32>
    %c45 = arith.constant 45 : index
    %244 = memref.load %arg1[%c45] : memref<98xf32, #tpu.memory_space<smem>>
    %245 = vector.broadcast %244 : f32 to vector<1x256xf32>
    %246 = arith.mulf %24, %245 : vector<1x256xf32>
    %247 = arith.addf %243, %246 : vector<1x256xf32>
    %c52 = arith.constant 52 : index
    %248 = memref.load %arg1[%c52] : memref<98xf32, #tpu.memory_space<smem>>
    %249 = vector.broadcast %248 : f32 to vector<1x256xf32>
    %250 = arith.mulf %25, %249 : vector<1x256xf32>
    %251 = arith.addf %247, %250 : vector<1x256xf32>
    %c59 = arith.constant 59 : index
    %252 = memref.load %arg1[%c59] : memref<98xf32, #tpu.memory_space<smem>>
    %253 = vector.broadcast %252 : f32 to vector<1x256xf32>
    %254 = arith.mulf %26, %253 : vector<1x256xf32>
    %255 = arith.addf %251, %254 : vector<1x256xf32>
    %c66 = arith.constant 66 : index
    %256 = memref.load %arg1[%c66] : memref<98xf32, #tpu.memory_space<smem>>
    %257 = vector.broadcast %256 : f32 to vector<1x256xf32>
    %258 = arith.mulf %27, %257 : vector<1x256xf32>
    %259 = arith.addf %255, %258 : vector<1x256xf32>
    %c73 = arith.constant 73 : index
    %260 = memref.load %arg1[%c73] : memref<98xf32, #tpu.memory_space<smem>>
    %261 = vector.broadcast %260 : f32 to vector<1x256xf32>
    %262 = arith.mulf %28, %261 : vector<1x256xf32>
    %263 = arith.addf %259, %262 : vector<1x256xf32>
    %c80_61 = arith.constant 80 : index
    %264 = memref.load %arg1[%c80_61] : memref<98xf32, #tpu.memory_space<smem>>
    %265 = vector.broadcast %264 : f32 to vector<1x256xf32>
    %266 = arith.mulf %29, %265 : vector<1x256xf32>
    %267 = arith.addf %263, %266 : vector<1x256xf32>
    %c87 = arith.constant 87 : index
    %268 = memref.load %arg1[%c87] : memref<98xf32, #tpu.memory_space<smem>>
    %269 = vector.broadcast %268 : f32 to vector<1x256xf32>
    %270 = arith.mulf %30, %269 : vector<1x256xf32>
    %271 = arith.addf %267, %270 : vector<1x256xf32>
    %c94 = arith.constant 94 : index
    %272 = memref.load %arg1[%c94] : memref<98xf32, #tpu.memory_space<smem>>
    %273 = vector.broadcast %272 : f32 to vector<1x256xf32>
    %274 = arith.mulf %31, %273 : vector<1x256xf32>
    %275 = arith.addf %271, %274 : vector<1x256xf32>
    %c0_62 = arith.constant 0 : index
    %c128_63 = arith.constant 128 : index
    %276 = vector.load %arg6[%c0_62, %c128_63] : memref<1x512xf32, #tpu.memory_space<vmem>>, vector<1x256xf32>
    tpu.vector_store %arg6[%c0_62, %c128_63], %275 {strides = array<i32>} : memref<1x512xf32, #tpu.memory_space<vmem>>, vector<1x256xf32>,
    %c0_64 = arith.constant 0 : index
    %c128_65 = arith.constant 128 : index
    %277 = vector.load %arg6[%c0_64, %c128_65] : memref<1x512xf32, #tpu.memory_space<vmem>>, vector<1x256xf32>
    %c3_66 = arith.constant 3 : index
    %c0_67 = arith.constant 0 : index
    %278 = vector.load %arg2[%c3_66, %c0_67] : memref<7x256xf32, #tpu.memory_space<vmem>>, vector<1x256xf32>
    %279 = arith.mulf %277, %278 : vector<1x256xf32>
    %280 = arith.addf %218, %279 : vector<1x256xf32>
    %cst_68 = arith.constant 0.000000e+00 : f32
    %281 = vector.broadcast %cst_68 : f32 to vector<1x256xf32>
    %c4 = arith.constant 4 : index
    %282 = memref.load %arg1[%c4] : memref<98xf32, #tpu.memory_space<smem>>
    %283 = vector.broadcast %282 : f32 to vector<1x256xf32>
    %284 = arith.mulf %18, %283 : vector<1x256xf32>
    %285 = arith.addf %281, %284 : vector<1x256xf32>
    %c11 = arith.constant 11 : index
    %286 = memref.load %arg1[%c11] : memref<98xf32, #tpu.memory_space<smem>>
    %287 = vector.broadcast %286 : f32 to vector<1x256xf32>
    %288 = arith.mulf %19, %287 : vector<1x256xf32>
    %289 = arith.addf %285, %288 : vector<1x256xf32>
    %c18 = arith.constant 18 : index
    %290 = memref.load %arg1[%c18] : memref<98xf32, #tpu.memory_space<smem>>
    %291 = vector.broadcast %290 : f32 to vector<1x256xf32>
    %292 = arith.mulf %20, %291 : vector<1x256xf32>
    %293 = arith.addf %289, %292 : vector<1x256xf32>
    %c25 = arith.constant 25 : index
    %294 = memref.load %arg1[%c25] : memref<98xf32, #tpu.memory_space<smem>>
    %295 = vector.broadcast %294 : f32 to vector<1x256xf32>
    %296 = arith.mulf %21, %295 : vector<1x256xf32>
    %297 = arith.addf %293, %296 : vector<1x256xf32>
    %c32 = arith.constant 32 : index
    %298 = memref.load %arg1[%c32] : memref<98xf32, #tpu.memory_space<smem>>
    %299 = vector.broadcast %298 : f32 to vector<1x256xf32>
    %300 = arith.mulf %22, %299 : vector<1x256xf32>
    %301 = arith.addf %297, %300 : vector<1x256xf32>
    %c39 = arith.constant 39 : index
    %302 = memref.load %arg1[%c39] : memref<98xf32, #tpu.memory_space<smem>>
    %303 = vector.broadcast %302 : f32 to vector<1x256xf32>
    %304 = arith.mulf %23, %303 : vector<1x256xf32>
    %305 = arith.addf %301, %304 : vector<1x256xf32>
    %c46 = arith.constant 46 : index
    %306 = memref.load %arg1[%c46] : memref<98xf32, #tpu.memory_space<smem>>
    %307 = vector.broadcast %306 : f32 to vector<1x256xf32>
    %308 = arith.mulf %24, %307 : vector<1x256xf32>
    %309 = arith.addf %305, %308 : vector<1x256xf32>
    %c53 = arith.constant 53 : index
    %310 = memref.load %arg1[%c53] : memref<98xf32, #tpu.memory_space<smem>>
    %311 = vector.broadcast %310 : f32 to vector<1x256xf32>
    %312 = arith.mulf %25, %311 : vector<1x256xf32>
    %313 = arith.addf %309, %312 : vector<1x256xf32>
    %c60 = arith.constant 60 : index
    %314 = memref.load %arg1[%c60] : memref<98xf32, #tpu.memory_space<smem>>
    %315 = vector.broadcast %314 : f32 to vector<1x256xf32>
    %316 = arith.mulf %26, %315 : vector<1x256xf32>
    %317 = arith.addf %313, %316 : vector<1x256xf32>
    %c67 = arith.constant 67 : index
    %318 = memref.load %arg1[%c67] : memref<98xf32, #tpu.memory_space<smem>>
    %319 = vector.broadcast %318 : f32 to vector<1x256xf32>
    %320 = arith.mulf %27, %319 : vector<1x256xf32>
    %321 = arith.addf %317, %320 : vector<1x256xf32>
    %c74 = arith.constant 74 : index
    %322 = memref.load %arg1[%c74] : memref<98xf32, #tpu.memory_space<smem>>
    %323 = vector.broadcast %322 : f32 to vector<1x256xf32>
    %324 = arith.mulf %28, %323 : vector<1x256xf32>
    %325 = arith.addf %321, %324 : vector<1x256xf32>
    %c81 = arith.constant 81 : index
    %326 = memref.load %arg1[%c81] : memref<98xf32, #tpu.memory_space<smem>>
    %327 = vector.broadcast %326 : f32 to vector<1x256xf32>
    %328 = arith.mulf %29, %327 : vector<1x256xf32>
    %329 = arith.addf %325, %328 : vector<1x256xf32>
    %c88 = arith.constant 88 : index
    %330 = memref.load %arg1[%c88] : memref<98xf32, #tpu.memory_space<smem>>
    %331 = vector.broadcast %330 : f32 to vector<1x256xf32>
    %332 = arith.mulf %30, %331 : vector<1x256xf32>
    %333 = arith.addf %329, %332 : vector<1x256xf32>
    %c95 = arith.constant 95 : index
    %334 = memref.load %arg1[%c95] : memref<98xf32, #tpu.memory_space<smem>>
    %335 = vector.broadcast %334 : f32 to vector<1x256xf32>
    %336 = arith.mulf %31, %335 : vector<1x256xf32>
    %337 = arith.addf %333, %336 : vector<1x256xf32>
    %c0_69 = arith.constant 0 : index
    %c128_70 = arith.constant 128 : index
    %338 = vector.load %arg6[%c0_69, %c128_70] : memref<1x512xf32, #tpu.memory_space<vmem>>, vector<1x256xf32>
    tpu.vector_store %arg6[%c0_69, %c128_70], %337 {strides = array<i32>} : memref<1x512xf32, #tpu.memory_space<vmem>>, vector<1x256xf32>,
    %c0_71 = arith.constant 0 : index
    %c129 = arith.constant 129 : index
    %339 = vector.load %arg6[%c0_71, %c129] : memref<1x512xf32, #tpu.memory_space<vmem>>, vector<1x256xf32>
    %c4_72 = arith.constant 4 : index
    %c0_73 = arith.constant 0 : index
    %340 = vector.load %arg2[%c4_72, %c0_73] : memref<7x256xf32, #tpu.memory_space<vmem>>, vector<1x256xf32>
    %341 = arith.mulf %339, %340 : vector<1x256xf32>
    %342 = arith.addf %280, %341 : vector<1x256xf32>
    %cst_74 = arith.constant 0.000000e+00 : f32
    %343 = vector.broadcast %cst_74 : f32 to vector<1x256xf32>
    %c5 = arith.constant 5 : index
    %344 = memref.load %arg1[%c5] : memref<98xf32, #tpu.memory_space<smem>>
    %345 = vector.broadcast %344 : f32 to vector<1x256xf32>
    %346 = arith.mulf %18, %345 : vector<1x256xf32>
    %347 = arith.addf %343, %346 : vector<1x256xf32>
    %c12 = arith.constant 12 : index
    %348 = memref.load %arg1[%c12] : memref<98xf32, #tpu.memory_space<smem>>
    %349 = vector.broadcast %348 : f32 to vector<1x256xf32>
    %350 = arith.mulf %19, %349 : vector<1x256xf32>
    %351 = arith.addf %347, %350 : vector<1x256xf32>
    %c19 = arith.constant 19 : index
    %352 = memref.load %arg1[%c19] : memref<98xf32, #tpu.memory_space<smem>>
    %353 = vector.broadcast %352 : f32 to vector<1x256xf32>
    %354 = arith.mulf %20, %353 : vector<1x256xf32>
    %355 = arith.addf %351, %354 : vector<1x256xf32>
    %c26 = arith.constant 26 : index
    %356 = memref.load %arg1[%c26] : memref<98xf32, #tpu.memory_space<smem>>
    %357 = vector.broadcast %356 : f32 to vector<1x256xf32>
    %358 = arith.mulf %21, %357 : vector<1x256xf32>
    %359 = arith.addf %355, %358 : vector<1x256xf32>
    %c33 = arith.constant 33 : index
    %360 = memref.load %arg1[%c33] : memref<98xf32, #tpu.memory_space<smem>>
    %361 = vector.broadcast %360 : f32 to vector<1x256xf32>
    %362 = arith.mulf %22, %361 : vector<1x256xf32>
    %363 = arith.addf %359, %362 : vector<1x256xf32>
    %c40 = arith.constant 40 : index
    %364 = memref.load %arg1[%c40] : memref<98xf32, #tpu.memory_space<smem>>
    %365 = vector.broadcast %364 : f32 to vector<1x256xf32>
    %366 = arith.mulf %23, %365 : vector<1x256xf32>
    %367 = arith.addf %363, %366 : vector<1x256xf32>
    %c47 = arith.constant 47 : index
    %368 = memref.load %arg1[%c47] : memref<98xf32, #tpu.memory_space<smem>>
    %369 = vector.broadcast %368 : f32 to vector<1x256xf32>
    %370 = arith.mulf %24, %369 : vector<1x256xf32>
    %371 = arith.addf %367, %370 : vector<1x256xf32>
    %c54 = arith.constant 54 : index
    %372 = memref.load %arg1[%c54] : memref<98xf32, #tpu.memory_space<smem>>
    %373 = vector.broadcast %372 : f32 to vector<1x256xf32>
    %374 = arith.mulf %25, %373 : vector<1x256xf32>
    %375 = arith.addf %371, %374 : vector<1x256xf32>
    %c61 = arith.constant 61 : index
    %376 = memref.load %arg1[%c61] : memref<98xf32, #tpu.memory_space<smem>>
    %377 = vector.broadcast %376 : f32 to vector<1x256xf32>
    %378 = arith.mulf %26, %377 : vector<1x256xf32>
    %379 = arith.addf %375, %378 : vector<1x256xf32>
    %c68 = arith.constant 68 : index
    %380 = memref.load %arg1[%c68] : memref<98xf32, #tpu.memory_space<smem>>
    %381 = vector.broadcast %380 : f32 to vector<1x256xf32>
    %382 = arith.mulf %27, %381 : vector<1x256xf32>
    %383 = arith.addf %379, %382 : vector<1x256xf32>
    %c75 = arith.constant 75 : index
    %384 = memref.load %arg1[%c75] : memref<98xf32, #tpu.memory_space<smem>>
    %385 = vector.broadcast %384 : f32 to vector<1x256xf32>
    %386 = arith.mulf %28, %385 : vector<1x256xf32>
    %387 = arith.addf %383, %386 : vector<1x256xf32>
    %c82 = arith.constant 82 : index
    %388 = memref.load %arg1[%c82] : memref<98xf32, #tpu.memory_space<smem>>
    %389 = vector.broadcast %388 : f32 to vector<1x256xf32>
    %390 = arith.mulf %29, %389 : vector<1x256xf32>
    %391 = arith.addf %387, %390 : vector<1x256xf32>
    %c89 = arith.constant 89 : index
    %392 = memref.load %arg1[%c89] : memref<98xf32, #tpu.memory_space<smem>>
    %393 = vector.broadcast %392 : f32 to vector<1x256xf32>
    %394 = arith.mulf %30, %393 : vector<1x256xf32>
    %395 = arith.addf %391, %394 : vector<1x256xf32>
    %c96_75 = arith.constant 96 : index
    %396 = memref.load %arg1[%c96_75] : memref<98xf32, #tpu.memory_space<smem>>
    %397 = vector.broadcast %396 : f32 to vector<1x256xf32>
    %398 = arith.mulf %31, %397 : vector<1x256xf32>
    %399 = arith.addf %395, %398 : vector<1x256xf32>
    %c0_76 = arith.constant 0 : index
    %c128_77 = arith.constant 128 : index
    %400 = vector.load %arg6[%c0_76, %c128_77] : memref<1x512xf32, #tpu.memory_space<vmem>>, vector<1x256xf32>
    tpu.vector_store %arg6[%c0_76, %c128_77], %399 {strides = array<i32>} : memref<1x512xf32, #tpu.memory_space<vmem>>, vector<1x256xf32>,
    %c0_78 = arith.constant 0 : index
    %c130 = arith.constant 130 : index
    %401 = vector.load %arg6[%c0_78, %c130] : memref<1x512xf32, #tpu.memory_space<vmem>>, vector<1x256xf32>
    %c5_79 = arith.constant 5 : index
    %c0_80 = arith.constant 0 : index
    %402 = vector.load %arg2[%c5_79, %c0_80] : memref<7x256xf32, #tpu.memory_space<vmem>>, vector<1x256xf32>
    %403 = arith.mulf %401, %402 : vector<1x256xf32>
    %404 = arith.addf %342, %403 : vector<1x256xf32>
    %cst_81 = arith.constant 0.000000e+00 : f32
    %405 = vector.broadcast %cst_81 : f32 to vector<1x256xf32>
    %c6 = arith.constant 6 : index
    %406 = memref.load %arg1[%c6] : memref<98xf32, #tpu.memory_space<smem>>
    %407 = vector.broadcast %406 : f32 to vector<1x256xf32>
    %408 = arith.mulf %18, %407 : vector<1x256xf32>
    %409 = arith.addf %405, %408 : vector<1x256xf32>
    %c13 = arith.constant 13 : index
    %410 = memref.load %arg1[%c13] : memref<98xf32, #tpu.memory_space<smem>>
    %411 = vector.broadcast %410 : f32 to vector<1x256xf32>
    %412 = arith.mulf %19, %411 : vector<1x256xf32>
    %413 = arith.addf %409, %412 : vector<1x256xf32>
    %c20 = arith.constant 20 : index
    %414 = memref.load %arg1[%c20] : memref<98xf32, #tpu.memory_space<smem>>
    %415 = vector.broadcast %414 : f32 to vector<1x256xf32>
    %416 = arith.mulf %20, %415 : vector<1x256xf32>
    %417 = arith.addf %413, %416 : vector<1x256xf32>
    %c27 = arith.constant 27 : index
    %418 = memref.load %arg1[%c27] : memref<98xf32, #tpu.memory_space<smem>>
    %419 = vector.broadcast %418 : f32 to vector<1x256xf32>
    %420 = arith.mulf %21, %419 : vector<1x256xf32>
    %421 = arith.addf %417, %420 : vector<1x256xf32>
    %c34 = arith.constant 34 : index
    %422 = memref.load %arg1[%c34] : memref<98xf32, #tpu.memory_space<smem>>
    %423 = vector.broadcast %422 : f32 to vector<1x256xf32>
    %424 = arith.mulf %22, %423 : vector<1x256xf32>
    %425 = arith.addf %421, %424 : vector<1x256xf32>
    %c41 = arith.constant 41 : index
    %426 = memref.load %arg1[%c41] : memref<98xf32, #tpu.memory_space<smem>>
    %427 = vector.broadcast %426 : f32 to vector<1x256xf32>
    %428 = arith.mulf %23, %427 : vector<1x256xf32>
    %429 = arith.addf %425, %428 : vector<1x256xf32>
    %c48 = arith.constant 48 : index
    %430 = memref.load %arg1[%c48] : memref<98xf32, #tpu.memory_space<smem>>
    %431 = vector.broadcast %430 : f32 to vector<1x256xf32>
    %432 = arith.mulf %24, %431 : vector<1x256xf32>
    %433 = arith.addf %429, %432 : vector<1x256xf32>
    %c55 = arith.constant 55 : index
    %434 = memref.load %arg1[%c55] : memref<98xf32, #tpu.memory_space<smem>>
    %435 = vector.broadcast %434 : f32 to vector<1x256xf32>
    %436 = arith.mulf %25, %435 : vector<1x256xf32>
    %437 = arith.addf %433, %436 : vector<1x256xf32>
    %c62 = arith.constant 62 : index
    %438 = memref.load %arg1[%c62] : memref<98xf32, #tpu.memory_space<smem>>
    %439 = vector.broadcast %438 : f32 to vector<1x256xf32>
    %440 = arith.mulf %26, %439 : vector<1x256xf32>
    %441 = arith.addf %437, %440 : vector<1x256xf32>
    %c69 = arith.constant 69 : index
    %442 = memref.load %arg1[%c69] : memref<98xf32, #tpu.memory_space<smem>>
    %443 = vector.broadcast %442 : f32 to vector<1x256xf32>
    %444 = arith.mulf %27, %443 : vector<1x256xf32>
    %445 = arith.addf %441, %444 : vector<1x256xf32>
    %c76 = arith.constant 76 : index
    %446 = memref.load %arg1[%c76] : memref<98xf32, #tpu.memory_space<smem>>
    %447 = vector.broadcast %446 : f32 to vector<1x256xf32>
    %448 = arith.mulf %28, %447 : vector<1x256xf32>
    %449 = arith.addf %445, %448 : vector<1x256xf32>
    %c83 = arith.constant 83 : index
    %450 = memref.load %arg1[%c83] : memref<98xf32, #tpu.memory_space<smem>>
    %451 = vector.broadcast %450 : f32 to vector<1x256xf32>
    %452 = arith.mulf %29, %451 : vector<1x256xf32>
    %453 = arith.addf %449, %452 : vector<1x256xf32>
    %c90 = arith.constant 90 : index
    %454 = memref.load %arg1[%c90] : memref<98xf32, #tpu.memory_space<smem>>
    %455 = vector.broadcast %454 : f32 to vector<1x256xf32>
    %456 = arith.mulf %30, %455 : vector<1x256xf32>
    %457 = arith.addf %453, %456 : vector<1x256xf32>
    %c97 = arith.constant 97 : index
    %458 = memref.load %arg1[%c97] : memref<98xf32, #tpu.memory_space<smem>>
    %459 = vector.broadcast %458 : f32 to vector<1x256xf32>
    %460 = arith.mulf %31, %459 : vector<1x256xf32>
    %461 = arith.addf %457, %460 : vector<1x256xf32>
    %c0_82 = arith.constant 0 : index
    %c128_83 = arith.constant 128 : index
    %462 = vector.load %arg6[%c0_82, %c128_83] : memref<1x512xf32, #tpu.memory_space<vmem>>, vector<1x256xf32>
    tpu.vector_store %arg6[%c0_82, %c128_83], %461 {strides = array<i32>} : memref<1x512xf32, #tpu.memory_space<vmem>>, vector<1x256xf32>,
    %c0_84 = arith.constant 0 : index
    %c131 = arith.constant 131 : index
    %463 = vector.load %arg6[%c0_84, %c131] : memref<1x512xf32, #tpu.memory_space<vmem>>, vector<1x256xf32>
    %c6_85 = arith.constant 6 : index
    %c0_86 = arith.constant 0 : index
    %464 = vector.load %arg2[%c6_85, %c0_86] : memref<7x256xf32, #tpu.memory_space<vmem>>, vector<1x256xf32>
    %465 = arith.mulf %463, %464 : vector<1x256xf32>
    %466 = arith.addf %404, %465 : vector<1x256xf32>
    %467 = arith.negf %466 : vector<1x256xf32>
    %468 = math.exp %467 : vector<1x256xf32>
    %cst_87 = arith.constant 1.000000e+00 : f32
    %469 = vector.broadcast %cst_87 : f32 to vector<1x256xf32>
    %470 = arith.addf %469, %468 : vector<1x256xf32>
    %471 = arith.divf %469, %470 : vector<1x256xf32>
    %c0_88 = arith.constant 0 : index
    %c0_89 = arith.constant 0 : index
    %c0_90 = arith.constant 0 : index
    %472 = vector.load %arg3[%c0_88, %c0_89, %c0_90] : memref<1x4x256xf32, #tpu.memory_space<vmem>>, vector<1x4x256xf32>
    %473 = vector.shape_cast %472 : vector<1x4x256xf32> to vector<4x256xf32>
    %474 = vector.broadcast %471 : vector<1x256xf32> to vector<4x256xf32>
    %475 = arith.mulf %473, %474 : vector<4x256xf32>
    %c0_91 = arith.constant 0 : index
    %c0_92 = arith.constant 0 : index
    %c0_93 = arith.constant 0 : index
    %476 = vector.load %arg4[%c0_91, %c0_92, %c0_93] : memref<1x4x256xf32, #tpu.memory_space<vmem>>, vector<1x4x256xf32>
    %477 = vector.shape_cast %476 : vector<1x4x256xf32> to vector<4x256xf32>
    %478 = vector.shape_cast %475 : vector<4x256xf32> to vector<1x4x256xf32>
    tpu.vector_store %arg4[%c0_91, %c0_92, %c0_93], %478 {strides = array<i32>} : memref<1x4x256xf32, #tpu.memory_space<vmem>>, vector<1x4x256xf32>,
    return
  }
  func.func @transform_0(%arg0: i32) -> i32 {
    %c0_i32 = arith.constant 0 : i32
    %c0_i32_0 = arith.constant 0 : i32
    return %c0_i32 : i32
  }
  func.func @transform_1(%arg0: i32) -> (i32, i32) {
    %c0_i32 = arith.constant 0 : i32
    %c0_i32_0 = arith.constant 0 : i32
    %c0_i32_1 = arith.constant 0 : i32
    return %c0_i32, %c0_i32_0 : i32, i32
  }
  func.func @transform_2(%arg0: i32) -> (i32, i32, i32) {
    %c0_i32 = arith.constant 0 : i32
    %c0_i32_0 = arith.constant 0 : i32
    %c0_i32_1 = arith.constant 0 : i32
    return %arg0, %c0_i32, %c0_i32_0 : i32, i32, i32
  }
  func.func @transform_3(%arg0: i32) -> (i32, i32, i32) {
    %c0_i32 = arith.constant 0 : i32
    %c0_i32_0 = arith.constant 0 : i32
    %c0_i32_1 = arith.constant 0 : i32
    return %arg0, %c0_i32, %c0_i32_0 : i32, i32, i32
  }
}

</mosaic_0001>

<llo_original>
// kernel: tpu_custom_call.1
$region0: #{tpu_custom_call.1}
  #allocation0 [shape = 'u32[]', space=smem, size = 0x4, offset = 0x4, fixed_abs, tag = 'smem constant byte address 0x4 - core index']
  #allocation1 [shape = 'u32[144,128]{1,0:T(1,128)}', space=vmem, size = 0x12000, scoped, tag = 'internal scratch']
  #allocation2 [shape = 'f32[2,512]{1,0:T(2,128)}', space=vmem, size = 0x1000, scoped, tag = 'scratch operand']
  #allocation3 [shape = 'f32[1,512]{1,0:T(1,128)}', space=vmem, size = 0x800, scoped, tag = 'scratch operand']
  %s0 = inlined_call_operand.hbm [shape: f32[98], index: 0, kind: input, shape index: {}]
  %s1 = inlined_call_operand.hbm [shape: f32[7,256], index: 1, kind: input, shape index: {}]
  %s2 = inlined_call_operand.hbm [shape: f32[2,4,256], index: 2, kind: input, shape index: {}]
  %s3 = inlined_call_operand.hbm [shape: f32[2,4,256], index: 3, kind: output, shape index: {}]
  %s4 = sld [smem:[#allocation0]]
  $region57: #{tpu_custom_call.1} parent=0
    _
  %s6 = ssub.s32 1, %s4
  %s7 = scalar_select 0, %s6, %s4
  $region1: #{tpu_custom_call.1} parent=0
    #allocation4 [shape = 'u8[512]{0}', space=smem, size = 0x200, scoped, tag = 'input window, operand 0, single buffered']
    #allocation5 [shape = 's32[2]{0}', space=sflag, size = 0x8, scoped, tag = 'scoped memory for tpu_custom_call.1']
    #allocation6 [shape = 's32[2]{0}', space=sflag, size = 0x8, scoped, tag = 'scoped memory for tpu_custom_call.1']
    #allocation7 [shape = 's32[2]{0}', space=sflag, size = 0x8, scoped, tag = 'scoped memory for tpu_custom_call.1']
    #allocation8 [shape = 'u8[8192]{0}', space=vmem, size = 0x2000, scoped, tag = 'input window, operand 1, single buffered']
    #allocation9 [shape = 'u8[8192]{0}', space=vmem, size = 0x2000, scoped, tag = 'input window, operand 2']
    #allocation10 [shape = 's32[2]{0}', space=sflag, size = 0x8, scoped, tag = 'scoped memory for tpu_custom_call.1']
    #allocation11 [shape = 'u8[8192]{0}', space=vmem, size = 0x2000, scoped, tag = 'output window, operand 0']
    %8 = vsyncpa [#allocation7], 0
    %9 = vsyncpa [#allocation5], 0
    %10 = vsyncpa [#allocation10], 0
    %s11 = scalar_lea.sflag [#allocation10], 1
    %12 = vsyncpa %s11, 0
    %13 = vsyncpa [#allocation6], 0
    %s14 = scalar_lea.sflag [#allocation6], 1
    %15 = vsyncpa %s14, 0
    loop: start=0, step=1, limit=4
    $region2: #{tpu_custom_call.1} parent=1 // loop_pre_header
      _
    $region3: #{tpu_custom_call.1} parent=1 // loop_header
      %s17 = sphi 0, %s21
      %p18 = scmp.ge.s32.totalorder %s17, 4
      %s25 = sphi 0, %s25
      %s27 = sphi 0, %s25
      %s28 = sphi 0, %s27
      %s42 = sphi 0, %s28
      %s46 = sphi 0, %s46
      %s48 = sphi 0, %s46
      %s49 = sphi 0, %s48
      %s63 = sphi 0, %s49
      %s69 = sphi 0, %s71
      %s72 = sphi 0, %s69
      %s73 = sphi 0, %s72
      %s89 = sphi 0, %s73
      %s95 = sphi 0, %s97
      %s98 = sphi 0, %s95
      %s99 = sphi 0, %s98
      %s115 = sphi 0, %s99
    $region4: #{tpu_custom_call.1} parent=1 // loop_header_branch
      %20 = sbr.rel (%p18) target = $region8
    $region5: #{tpu_custom_call.1} parent=1 // loop_body
      %s22 = ssub.s32 %s17, 1
      %s23 = ssub.s32 %s17, 2
      %s24 = sadd.s32 %s17, 1
      %s26 = sadd.s32 %s25, 1
      %p29 = scmp.eq.s32.totalorder %s17, 1
      %p30 = scmp.ne.s32.totalorder %s25, %s27
      %p31 = scmp.eq.s32.totalorder %s17, 0
      %p32 = por %p30, %p31
      %p33 = scmp.ne.s32.totalorder %s25, %s27
      %p34 = scmp.eq.s32.totalorder %s22, 1
      %p35 = por %p33, %p34
      %p36 = scmp.ne.s32.totalorder %s27, %s28
      %p37 = scmp.eq.s32.totalorder %s22, 0
      %p38 = por %p36, %p37
      %p39 = scmp.ne.s32.totalorder %s27, %s28
      %p40 = scmp.eq.s32.totalorder %s23, 1
      %p41 = por %p39, %p40
      %p43 = scmp.ne.s32.totalorder %s28, %s42
      %p44 = scmp.eq.s32.totalorder %s23, 0
      %p45 = por %p43, %p44
      %s47 = sadd.s32 %s46, 1
      %p50 = scmp.eq.s32.totalorder %s17, 1
      %p51 = scmp.ne.s32.totalorder %s46, %s48
      %p52 = scmp.eq.s32.totalorder %s17, 0
      %p53 = por %p51, %p52
      %p54 = scmp.ne.s32.totalorder %s46, %s48
      %p55 = scmp.eq.s32.totalorder %s22, 1
      %p56 = por %p54, %p55
      %p57 = scmp.ne.s32.totalorder %s48, %s49
      %p58 = scmp.eq.s32.totalorder %s22, 0
      %p59 = por %p57, %p58
      %p60 = scmp.ne.s32.totalorder %s48, %s49
      %p61 = scmp.eq.s32.totalorder %s23, 1
      %p62 = por %p60, %p61
      %p64 = scmp.ne.s32.totalorder %s49, %s63
      %p65 = scmp.eq.s32.totalorder %s23, 0
      %p66 = por %p64, %p65
      %s67 = ssub.s32 %s17, %s24
      %p68 = scmp.eq.s32.totalorder %s67, 0
      %s70 = sadd.s32 %s69, 1
      %s71 = scalar_select %p68, %s69, %s70
      %p74 = pneg %p68
      %p75 = scmp.eq.s32.totalorder %s17, 1
      %p76 = por %p74, %p75
      %p77 = scmp.ne.s32.totalorder %s69, %s72
      %p78 = scmp.eq.s32.totalorder %s17, 0
      %p79 = por %p77, %p78
      %p80 = scmp.ne.s32.totalorder %s69, %s72
      %p81 = scmp.eq.s32.totalorder %s22, 1
      %p82 = por %p80, %p81
      %p83 = scmp.ne.s32.totalorder %s72, %s73
      %p84 = scmp.eq.s32.totalorder %s22, 0
      %p85 = por %p83, %p84
      %p86 = scmp.ne.s32.totalorder %s72, %s73
      %p87 = scmp.eq.s32.totalorder %s23, 1
      %p88 = por %p86, %p87
      %p90 = scmp.ne.s32.totalorder %s73, %s89
      %p91 = scmp.eq.s32.totalorder %s23, 0
      %p92 = por %p90, %p91
      %s93 = ssub.s32 %s17, %s24
      %p94 = scmp.eq.s32.totalorder %s93, 0
      %s96 = sadd.s32 %s95, 1
      %s97 = scalar_select %p94, %s95, %s96
      %p100 = pneg %p94
      %p101 = scmp.eq.s32.totalorder %s17, 1
      %p102 = por %p100, %p101
      %p103 = scmp.ne.s32.totalorder %s95, %s98
      %p104 = scmp.eq.s32.totalorder %s17, 0
      %p105 = por %p103, %p104
      %p106 = scmp.ne.s32.totalorder %s95, %s98
      %p107 = scmp.eq.s32.totalorder %s22, 1
      %p108 = por %p106, %p107
      %p109 = scmp.ne.s32.totalorder %s98, %s99
      %p110 = scmp.eq.s32.totalorder %s22, 0
      %p111 = por %p109, %p110
      %p112 = scmp.ne.s32.totalorder %s98, %s99
      %p113 = scmp.eq.s32.totalorder %s23, 1
      %p114 = por %p112, %p113
      %p116 = scmp.ne.s32.totalorder %s99, %s115
      %p117 = scmp.eq.s32.totalorder %s23, 0
      %p118 = por %p116, %p117
      %p119 = scmp.le.s32.totalorder 1, %s17
      %p120 = scmp.lt.s32.totalorder %s17, 3
      %p121 = pnand %p119, %p120
      %p122 = pneg %p121
      // Predicated region
      $region9: #{tpu_custom_call.1} parent=5 // pred_check
        _
      $region10: #{tpu_custom_call.1} parent=5 // pred_check_branch
        %124 = sbr.rel (%p121) target = $region12
      $region11: #{tpu_custom_call.1} parent=5 // pred_region
        %s125 = ssub.s32 %s17, 1
        // Predicated region
        $region13: #{tpu_custom_call.1} parent=11 // pred_check
          %p126 = pneg %p38
        $region14: #{tpu_custom_call.1} parent=11 // pred_check_branch
          %128 = sbr.rel (%p126) target = $region16
        $region15: #{tpu_custom_call.1} parent=11 // pred_region
          %s130 = ssub.s32 16, 16
          %131 = vsyncadd [#allocation7], %s130
          %134 = dma.hbm_to_smem %s0, 16, [#allocation4], [#allocation7]
        $region16: #{tpu_custom_call.1} parent=11 // pred_fallthru
          _
        // Predicated region
        $region17: #{tpu_custom_call.1} parent=11 // pred_check
          %p135 = pneg %p59
        $region18: #{tpu_custom_call.1} parent=11 // pred_check_branch
          %137 = sbr.rel (%p135) target = $region20
        $region19: #{tpu_custom_call.1} parent=11 // pred_region
          %s139 = ssub.s32 256, 256
          %140 = vsyncadd [#allocation5], %s139
          %s142 = sshll.u32 [#allocation8], 4
          %s143 = int_to_ptr.vmem [resolvable:$true] %s142
          %145 = dma.hbm_to_vmem [thread:$0]  %s1, 256, %s143, [#allocation5]
        $region20: #{tpu_custom_call.1} parent=11 // pred_fallthru
          _
      $region12: #{tpu_custom_call.1} parent=5 // pred_fallthru
        _
      %p146 = scmp.lt.s32.totalorder %s17, 2
      // Predicated region
      $region21: #{tpu_custom_call.1} parent=5 // pred_check
        %p147 = pneg %p146
      $region22: #{tpu_custom_call.1} parent=5 // pred_check_branch
        %149 = sbr.rel (%p147) target = $region24
      $region23: #{tpu_custom_call.1} parent=5 // pred_region
        // Predicated region
        $region25: #{tpu_custom_call.1} parent=23 // pred_check
          %p150 = pneg %p79
        $region26: #{tpu_custom_call.1} parent=23 // pred_check_branch
          %152 = sbr.rel (%p150) target = $region28
        $region27: #{tpu_custom_call.1} parent=23 // pred_region
          %s153 = sand.u32 %s69, 1
          %s154 = scalar_lea.sflag [#allocation10], %s153
          %s155 = sand.u32 %s69, 1
          %s156 = smul.addr %s155, 8
          %s157 = scalar_lea.vmem [#allocation9], %s156
          %s159 = ssub.s32 128, 128
          %160 = vsyncadd %s154, %s159
          %s161 = smul.addr %s17, 2
          %s162 = smul.addr %s161, 64
          %s163 = scalar_lea.hbm %s2, %s162
          %s165 = sshll.u32 %s157, 4
          %s166 = int_to_ptr.vmem [resolvable:$true] %s165
          %168 = dma.hbm_to_vmem [thread:$0]  %s163, 128, %s166, %s154
        $region28: #{tpu_custom_call.1} parent=23 // pred_fallthru
          _
      $region24: #{tpu_custom_call.1} parent=5 // pred_fallthru
        _
      %p169 = scmp.le.s32.totalorder 1, %s17
      %p170 = scmp.lt.s32.totalorder %s17, 3
      %p171 = pnand %p169, %p170
      %p172 = pneg %p171
      // Predicated region
      $region29: #{tpu_custom_call.1} parent=5 // pred_check
        _
      $region30: #{tpu_custom_call.1} parent=5 // pred_check_branch
        %174 = sbr.rel (%p171) target = $region32
      $region31: #{tpu_custom_call.1} parent=5 // pred_region
        %s175 = ssub.s32 %s17, 1
        // Predicated region
        $region33: #{tpu_custom_call.1} parent=31 // pred_check
          %p176 = pneg %p38
        $region34: #{tpu_custom_call.1} parent=31 // pred_check_branch
          %178 = sbr.rel (%p176) target = $region36
        $region35: #{tpu_custom_call.1} parent=31 // pred_region
          %179 = dma.done [#allocation7], 16
        $region36: #{tpu_custom_call.1} parent=31 // pred_fallthru
          _
        // Predicated region
        $region37: #{tpu_custom_call.1} parent=31 // pred_check
          %p180 = pneg %p59
        $region38: #{tpu_custom_call.1} parent=31 // pred_check_branch
          %182 = sbr.rel (%p180) target = $region40
        $region39: #{tpu_custom_call.1} parent=31 // pred_region
          %183 = dma.done [#allocation5], 256
        $region40: #{tpu_custom_call.1} parent=31 // pred_fallthru
          _
        %s184 = sand.u32 %s72, 1
        %s185 = scalar_lea.sflag [#allocation10], %s184
        %s186 = sand.u32 %s72, 1
        %s187 = smul.addr %s186, 8
        %s188 = scalar_lea.vmem [#allocation9], %s187
        // Predicated region
        $region41: #{tpu_custom_call.1} parent=31 // pred_check
          %p189 = pneg %p85
        $region42: #{tpu_custom_call.1} parent=31 // pred_check_branch
          %191 = sbr.rel (%p189) target = $region44
        $region43: #{tpu_custom_call.1} parent=31 // pred_region
          %192 = dma.done %s185, 128
        $region44: #{tpu_custom_call.1} parent=31 // pred_fallthru
          _
        %193 = sfence
        %p194 = pneg %p38
        %p195 = pneg %p35
        %p196 = pneg %p59
        %p197 = pneg %p56
        %s198 = sand.u32 %s72, 1
        %s199 = scalar_lea.sflag [#allocation10], %s198
        %s200 = sand.u32 %s72, 1
        %s201 = smul.addr %s200, 8
        %s202 = scalar_lea.vmem [#allocation9], %s201
        %p203 = pneg %p85
        %p204 = pneg %p82
        %p205 = pneg %p111
        %p206 = pneg %p108
        %s207 = sand.u32 %s98, 1
        %s208 = scalar_lea.sflag [#allocation6], %s207
        %s209 = sand.u32 %s98, 1
        %s210 = smul.addr %s209, 8
        %s211 = scalar_lea.vmem [#allocation11], %s210
        %v212 = vld [vmem:[%s188] sm:$0xff]
        %v214 = vcombine.high %v212, %v212
        %vm216 = vcmask 1043456
        %v217 = vsel %vm216, %v212, 0.0
        %v218 = vrot.slane %v217, 4
        %v219 = vadd.f32 %v217, %v218
        %v220 = vrot.slane %v219, 2
        %v221 = vadd.f32 %v219, %v220
        %v222 = vrot.slane %v221, 1
        %v223 = vadd.f32 %v221, %v222
        %v224 = vsel %vm216, %v214, 0.0
        %v225 = vrot.slane %v224, 4
        %v226 = vadd.f32 %v224, %v225
        %v227 = vrot.slane %v226, 2
        %v228 = vadd.f32 %v226, %v227
        %v229 = vrot.slane %v228, 1
        %v230 = vadd.f32 %v228, %v229
        %v231 = vrcp.pop 4.0
        %v232 = vmul.f32 %v223, %v231
        %v233 = vmul.f32 %v230, %v231
        %v234 = vsel %vm216, %v212, -inf
        %v235 = vrot.slane %v234, 4
        %v236 = vmax.f32 %v234, %v235
        %v237 = vrot.slane %v236, 2
        %v238 = vmax.f32 %v236, %v237
        %v239 = vrot.slane %v238, 1
        %v240 = vmax.f32 %v238, %v239
        %v241 = vsel %vm216, %v214, -inf
        %v242 = vrot.slane %v241, 4
        %v243 = vmax.f32 %v241, %v242
        %v244 = vrot.slane %v243, 2
        %v245 = vmax.f32 %v243, %v244
        %v246 = vrot.slane %v245, 1
        %v247 = vmax.f32 %v245, %v246
        %248 = vst [vmem:[#allocation2] sm:$0x3] 0.0
        %249 = vst [vmem:[#allocation2 + $0x6] sm:$0x3] 0.0
        %v250 = vlaneseq
        %vm251 = vcmp.ge.s32.totalorder %v250, 0
        %vm252 = vcmp.lt.s32.totalorder %v250, 128
        %vm253 = vmand %vm251, %vm252
        %254 = vst.msk [vmem:[#allocation3] sm:$0x1] %vm253, 0.0
        %255 = vst.msk [vmem:[#allocation3 + $0x3] sm:$0x1] %vm253, 0.0
        %v258 = vcombine.low %v232, %v233
        %v260 = vunpack.c.l.s4 1966171168
        %v261 = vunpack.c.0.s8 %v260
        %v262 = vlaneseq
        %v263 = vshrl.u32 %v262, 7
        %v264 = vsub.s32 %v261, %v263
        %v265 = vrot.slane %v258, %v264
        %v267 = vunpack.c.l.s4 1966171168
        %v268 = vunpack.c.0.s8 %v267
        %v269 = vlaneseq
        %v270 = vshrl.u32 %v269, 7
        %v271 = vsub.s32 %v268, %v270
        %v272 = vrot.slane %v265, %v271
        %vm274 = vcmp.lt.s32.totalorder %v250, 256
        %vm275 = vmand %vm251, %vm274
        %s276 = scalar_lea.vmem [#allocation2], 2
        %277 = vst.msk [vmem:[%s276] ss:$2 sm:$0x3] %vm275, %v272
        %v280 = vcombine.low %v240, %v247
        %v282 = vunpack.c.l.s4 1966171168
        %v283 = vunpack.c.0.s8 %v282
        %v284 = vlaneseq
        %v285 = vshrl.u32 %v284, 7
        %v286 = vsub.s32 %v283, %v285
        %v287 = vrot.slane %v280, %v286
        %v289 = vunpack.c.l.s4 1966171168
        %v290 = vunpack.c.0.s8 %v289
        %v291 = vlaneseq
        %v292 = vshrl.u32 %v291, 7
        %v293 = vsub.s32 %v290, %v292
        %v294 = vrot.slane %v287, %v293
        %s296 = scalar_lea.vmem [#allocation2], 3
        %297 = vst.msk [vmem:[%s296] ss:$2 sm:$0x3] %vm275, %v294
        %v298 = vld [vmem:[#allocation2] ss:$2 sm:$0x7]
        %v299 = vld [vmem:[%s276] ss:$2 sm:$0x3]
        %s300 = scalar_lea.vmem [#allocation2], 2
        %v301 = vld [vmem:[%s300] ss:$2 sm:$0x7]
        %s302 = scalar_lea.vmem [#allocation2], 1
        %v303 = vld [vmem:[%s302] ss:$2 sm:$0x7]
        %v304 = vld [vmem:[%s296] ss:$2 sm:$0x3]
        %s305 = scalar_lea.vmem [#allocation2], 3
        %v306 = vld [vmem:[%s305] ss:$2 sm:$0x7]
        %s307 = sld [smem:[#allocation4]]
        %v308 = vstv %s307
        %v309 = vmul.f32 %v298, %v308
        %v310 = vadd.f32 %v309, 0.0
        %s311 = sld [smem:[#allocation4 + $0x7]]
        %v312 = vstv %s311
        %v313 = vmul.f32 %v298, %v312
        %315 = vrot.lane.b32.xlu0 %v313, 112
        %v316 = vpop.permute.xlu0 %315
        %v317 = vrot.slane %v316, 1
        %vm318 = vcmask 916480
        %v319 = vsel %vm318, %v316, %v317
        %v321 = vadd.f32 %v310, %v319
        %s322 = sld [smem:[#allocation4 + $0xe]]
        %v323 = vstv %s322
        %v324 = vmul.f32 %v298, %v323
        %326 = vrot.lane.b32.xlu0 %v324, 96
        %v327 = vpop.permute.xlu0 %326
        %v328 = vrot.slane %v327, 1
        %vm329 = vcmask 785408
        %v330 = vsel %vm329, %v327, %v328
        %v332 = vadd.f32 %v321, %v330
        %s333 = sld [smem:[#allocation4 + $0x15]]
        %v334 = vstv %s333
        %v335 = vmul.f32 %v299, %v334
        %337 = vrot.lane.b32.xlu0 %v335, 80
        %v338 = vpop.permute.xlu0 %337
        %v339 = vrot.slane %v338, 7
        %vm340 = vcmask 654336
        %v341 = vsel %vm340, %v339, %v338
        %v343 = vadd.f32 %v332, %v341
        %s344 = sld [smem:[#allocation4 + $0x1c]]
        %v345 = vstv %s344
        %v346 = vmul.f32 %v301, %v345
        %348 = vrot.lane.b32.xlu0 %v346, 64
        %v349 = vpop.permute.xlu0 %348
        %v350 = vrot.slane %v349, 7
        %vm351 = vcmask 523264
        %v352 = vsel %vm351, %v350, %v349
        %v354 = vadd.f32 %v343, %v352
        %s355 = sld [smem:[#allocation4 + $0x23]]
        %v356 = vstv %s355
        %v357 = vmul.f32 %v301, %v356
        %359 = vrot.lane.b32.xlu0 %v357, 48
        %v360 = vpop.permute.xlu0 %359
        %v361 = vrot.slane %v360, 7
        %vm362 = vcmask 392192
        %v363 = vsel %vm362, %v361, %v360
        %v365 = vadd.f32 %v354, %v363
        %s366 = sld [smem:[#allocation4 + $0x2a]]
        %v367 = vstv %s366
        %v368 = vmul.f32 %v301, %v367
        %370 = vrot.lane.b32.xlu0 %v368, 32
        %v371 = vpop.permute.xlu0 %370
        %v372 = vrot.slane %v371, 7
        %vm373 = vcmask 261120
        %v374 = vsel %vm373, %v372, %v371
        %v376 = vadd.f32 %v365, %v374
        %s377 = sld [smem:[#allocation4 + $0x31]]
        %v378 = vstv %s377
        %v379 = vmul.f32 %v303, %v378
        %v380 = vadd.f32 %v376, %v379
        %s381 = sld [smem:[#allocation4 + $0x38]]
        %v382 = vstv %s381
        %v383 = vmul.f32 %v303, %v382
        %385 = vrot.lane.b32.xlu0 %v383, 112
        %v386 = vpop.permute.xlu0 %385
        %v387 = vrot.slane %v386, 1
        %v388 = vsel %vm318, %v386, %v387
        %v390 = vadd.f32 %v380, %v388
        %s391 = sld [smem:[#allocation4 + $0x3f]]
        %v392 = vstv %s391
        %v393 = vmul.f32 %v303, %v392
        %395 = vrot.lane.b32.xlu0 %v393, 96
        %v396 = vpop.permute.xlu0 %395
        %v397 = vrot.slane %v396, 1
        %v398 = vsel %vm329, %v396, %v397
        %v400 = vadd.f32 %v390, %v398
        %s401 = sld [smem:[#allocation4 + $0x46]]
        %v402 = vstv %s401
        %v403 = vmul.f32 %v304, %v402
        %405 = vrot.lane.b32.xlu0 %v403, 80
        %v406 = vpop.permute.xlu0 %405
        %v407 = vrot.slane %v406, 7
        %v408 = vsel %vm340, %v407, %v406
        %v410 = vadd.f32 %v400, %v408
        %s411 = sld [smem:[#allocation4 + $0x4d]]
        %v412 = vstv %s411
        %v413 = vmul.f32 %v306, %v412
        %415 = vrot.lane.b32.xlu0 %v413, 64
        %v416 = vpop.permute.xlu0 %415
        %v417 = vrot.slane %v416, 7
        %v418 = vsel %vm351, %v417, %v416
        %v420 = vadd.f32 %v410, %v418
        %s421 = sld [smem:[#allocation4 + $0x54]]
        %v422 = vstv %s421
        %v423 = vmul.f32 %v306, %v422
        %425 = vrot.lane.b32.xlu0 %v423, 48
        %v426 = vpop.permute.xlu0 %425
        %v427 = vrot.slane %v426, 7
        %v428 = vsel %vm362, %v427, %v426
        %v430 = vadd.f32 %v420, %v428
        %s431 = sld [smem:[#allocation4 + $0x5b]]
        %v432 = vstv %s431
        %v433 = vmul.f32 %v306, %v432
        %435 = vrot.lane.b32.xlu0 %v433, 32
        %v436 = vpop.permute.xlu0 %435
        %v437 = vrot.slane %v436, 7
        %v438 = vsel %vm373, %v437, %v436
        %v440 = vadd.f32 %v430, %v438
        %442 = vrot.lane.b32.xlu0 %v440, 48
        %v443 = vpop.permute.xlu0 %442
        %v444 = vrot.slane %v443, 1
        %v445 = vsel %vm362, %v443, %v444
        %447 = vst.msk [vmem:[#allocation3 + $0x1] sm:$0x3] %vm275, %v445
        %v448 = vld [vmem:[#allocation3] sm:$0x7]
        %v449 = vld [vmem:[#allocation8] ss:$8 sm:$0x3]
        %451 = vrot.lane.b32.xlu0 %v449, 125
        %v452 = vpop.permute.xlu0 %451
        %v453 = vrot.slane %v452, 7
        %vm454 = vcmask 1022976
        %v455 = vsel %vm454, %v453, %v452
        %v457 = vmul.f32 %v448, %v455
        %v458 = vadd.f32 %v457, 0.0
        %s459 = sld [smem:[#allocation4 + $0x1]]
        %v460 = vstv %s459
        %v461 = vmul.f32 %v298, %v460
        %v462 = vadd.f32 %v461, 0.0
        %s463 = sld [smem:[#allocation4 + $0x8]]
        %v464 = vstv %s463
        %v465 = vmul.f32 %v298, %v464
        %467 = vrot.lane.b32.xlu0 %v465, 112
        %v468 = vpop.permute.xlu0 %467
        %v469 = vrot.slane %v468, 1
        %v470 = vsel %vm318, %v468, %v469
        %v472 = vadd.f32 %v462, %v470
        %s473 = sld [smem:[#allocation4 + $0xf]]
        %v474 = vstv %s473
        %v475 = vmul.f32 %v298, %v474
        %477 = vrot.lane.b32.xlu0 %v475, 96
        %v478 = vpop.permute.xlu0 %477
        %v479 = vrot.slane %v478, 1
        %v480 = vsel %vm329, %v478, %v479
        %v482 = vadd.f32 %v472, %v480
        %s483 = sld [smem:[#allocation4 + $0x16]]
        %v484 = vstv %s483
        %v485 = vmul.f32 %v299, %v484
        %487 = vrot.lane.b32.xlu0 %v485, 80
        %v488 = vpop.permute.xlu0 %487
        %v489 = vrot.slane %v488, 7
        %v490 = vsel %vm340, %v489, %v488
        %v492 = vadd.f32 %v482, %v490
        %s493 = sld [smem:[#allocation4 + $0x1d]]
        %v494 = vstv %s493
        %v495 = vmul.f32 %v301, %v494
        %497 = vrot.lane.b32.xlu0 %v495, 64
        %v498 = vpop.permute.xlu0 %497
        %v499 = vrot.slane %v498, 7
        %v500 = vsel %vm351, %v499, %v498
        %v502 = vadd.f32 %v492, %v500
        %s503 = sld [smem:[#allocation4 + $0x24]]
        %v504 = vstv %s503
        %v505 = vmul.f32 %v301, %v504
        %507 = vrot.lane.b32.xlu0 %v505, 48
        %v508 = vpop.permute.xlu0 %507
        %v509 = vrot.slane %v508, 7
        %v510 = vsel %vm362, %v509, %v508
        %v512 = vadd.f32 %v502, %v510
        %s513 = sld [smem:[#allocation4 + $0x2b]]
        %v514 = vstv %s513
        %v515 = vmul.f32 %v301, %v514
        %517 = vrot.lane.b32.xlu0 %v515, 32
        %v518 = vpop.permute.xlu0 %517
        %v519 = vrot.slane %v518, 7
        %v520 = vsel %vm373, %v519, %v518
        %v522 = vadd.f32 %v512, %v520
        %s523 = sld [smem:[#allocation4 + $0x32]]
        %v524 = vstv %s523
        %v525 = vmul.f32 %v303, %v524
        %v526 = vadd.f32 %v522, %v525
        %s527 = sld [smem:[#allocation4 + $0x39]]
        %v528 = vstv %s527
        %v529 = vmul.f32 %v303, %v528
        %531 = vrot.lane.b32.xlu0 %v529, 112
        %v532 = vpop.permute.xlu0 %531
        %v533 = vrot.slane %v532, 1
        %v534 = vsel %vm318, %v532, %v533
        %v536 = vadd.f32 %v526, %v534
        %s537 = sld [smem:[#allocation4 + $0x40]]
        %v538 = vstv %s537
        %v539 = vmul.f32 %v303, %v538
        %541 = vrot.lane.b32.xlu0 %v539, 96
        %v542 = vpop.permute.xlu0 %541
        %v543 = vrot.slane %v542, 1
        %v544 = vsel %vm329, %v542, %v543
        %v546 = vadd.f32 %v536, %v544
        %s547 = sld [smem:[#allocation4 + $0x47]]
        %v548 = vstv %s547
        %v549 = vmul.f32 %v304, %v548
        %551 = vrot.lane.b32.xlu0 %v549, 80
        %v552 = vpop.permute.xlu0 %551
        %v553 = vrot.slane %v552, 7
        %v554 = vsel %vm340, %v553, %v552
        %v556 = vadd.f32 %v546, %v554
        %s557 = sld [smem:[#allocation4 + $0x4e]]
        %v558 = vstv %s557
        %v559 = vmul.f32 %v306, %v558
        %561 = vrot.lane.b32.xlu0 %v559, 64
        %v562 = vpop.permute.xlu0 %561
        %v563 = vrot.slane %v562, 7
        %v564 = vsel %vm351, %v563, %v562
        %v566 = vadd.f32 %v556, %v564
        %s567 = sld [smem:[#allocation4 + $0x55]]
        %v568 = vstv %s567
        %v569 = vmul.f32 %v306, %v568
        %571 = vrot.lane.b32.xlu0 %v569, 48
        %v572 = vpop.permute.xlu0 %571
        %v573 = vrot.slane %v572, 7
        %v574 = vsel %vm362, %v573, %v572
        %v576 = vadd.f32 %v566, %v574
        %s577 = sld [smem:[#allocation4 + $0x5c]]
        %v578 = vstv %s577
        %v579 = vmul.f32 %v306, %v578
        %581 = vrot.lane.b32.xlu0 %v579, 32
        %v582 = vpop.permute.xlu0 %581
        %v583 = vrot.slane %v582, 7
        %v584 = vsel %vm373, %v583, %v582
        %v586 = vadd.f32 %v576, %v584
        %588 = vrot.lane.b32.xlu0 %v586, 48
        %v589 = vpop.permute.xlu0 %588
        %v590 = vrot.slane %v589, 1
        %v591 = vsel %vm362, %v589, %v590
        %593 = vst.msk [vmem:[#allocation3 + $0x1] sm:$0x3] %vm275, %v591
        %v594 = vld [vmem:[#allocation3] sm:$0x7]
        %s595 = scalar_lea.vmem [#allocation8], 1
        %v596 = vld [vmem:[%s595] ss:$8 sm:$0x3]
        %598 = vrot.lane.b32.xlu0 %v596, 126
        %v599 = vpop.permute.xlu0 %598
        %v600 = vrot.slane %v599, 7
        %vm601 = vcmask 1031168
        %v602 = vsel %vm601, %v600, %v599
        %v604 = vmul.f32 %v594, %v602
        %606 = vrot.lane.b32.xlu0 %v604, 127
        %v607 = vpop.permute.xlu0 %606
        %v608 = vrot.slane %v607, 1
        %vm609 = vcmask 1039360
        %v610 = vsel %vm609, %v607, %v608
        %v612 = vadd.f32 %v458, %v610
        %s613 = sld [smem:[#allocation4 + $0x2]]
        %v614 = vstv %s613
        %v615 = vmul.f32 %v298, %v614
        %v616 = vadd.f32 %v615, 0.0
        %s617 = sld [smem:[#allocation4 + $0x9]]
        %v618 = vstv %s617
        %v619 = vmul.f32 %v298, %v618
        %621 = vrot.lane.b32.xlu0 %v619, 112
        %v622 = vpop.permute.xlu0 %621
        %v623 = vrot.slane %v622, 1
        %v624 = vsel %vm318, %v622, %v623
        %v626 = vadd.f32 %v616, %v624
        %s627 = sld [smem:[#allocation4 + $0x10]]
        %v628 = vstv %s627
        %v629 = vmul.f32 %v298, %v628
        %631 = vrot.lane.b32.xlu0 %v629, 96
        %v632 = vpop.permute.xlu0 %631
        %v633 = vrot.slane %v632, 1
        %v634 = vsel %vm329, %v632, %v633
        %v636 = vadd.f32 %v626, %v634
        %s637 = sld [smem:[#allocation4 + $0x17]]
        %v638 = vstv %s637
        %v639 = vmul.f32 %v299, %v638
        %641 = vrot.lane.b32.xlu0 %v639, 80
        %v642 = vpop.permute.xlu0 %641
        %v643 = vrot.slane %v642, 7
        %v644 = vsel %vm340, %v643, %v642
        %v646 = vadd.f32 %v636, %v644
        %s647 = sld [smem:[#allocation4 + $0x1e]]
        %v648 = vstv %s647
        %v649 = vmul.f32 %v301, %v648
        %651 = vrot.lane.b32.xlu0 %v649, 64
        %v652 = vpop.permute.xlu0 %651
        %v653 = vrot.slane %v652, 7
        %v654 = vsel %vm351, %v653, %v652
        %v656 = vadd.f32 %v646, %v654
        %s657 = sld [smem:[#allocation4 + $0x25]]
        %v658 = vstv %s657
        %v659 = vmul.f32 %v301, %v658
        %661 = vrot.lane.b32.xlu0 %v659, 48
        %v662 = vpop.permute.xlu0 %661
        %v663 = vrot.slane %v662, 7
        %v664 = vsel %vm362, %v663, %v662
        %v666 = vadd.f32 %v656, %v664
        %s667 = sld [smem:[#allocation4 + $0x2c]]
        %v668 = vstv %s667
        %v669 = vmul.f32 %v301, %v668
        %671 = vrot.lane.b32.xlu0 %v669, 32
        %v672 = vpop.permute.xlu0 %671
        %v673 = vrot.slane %v672, 7
        %v674 = vsel %vm373, %v673, %v672
        %v676 = vadd.f32 %v666, %v674
        %s677 = sld [smem:[#allocation4 + $0x33]]
        %v678 = vstv %s677
        %v679 = vmul.f32 %v303, %v678
        %v680 = vadd.f32 %v676, %v679
        %s681 = sld [smem:[#allocation4 + $0x3a]]
        %v682 = vstv %s681
        %v683 = vmul.f32 %v303, %v682
        %685 = vrot.lane.b32.xlu0 %v683, 112
        %v686 = vpop.permute.xlu0 %685
        %v687 = vrot.slane %v686, 1
        %v688 = vsel %vm318, %v686, %v687
        %v690 = vadd.f32 %v680, %v688
        %s691 = sld [smem:[#allocation4 + $0x41]]
        %v692 = vstv %s691
        %v693 = vmul.f32 %v303, %v692
        %695 = vrot.lane.b32.xlu0 %v693, 96
        %v696 = vpop.permute.xlu0 %695
        %v697 = vrot.slane %v696, 1
        %v698 = vsel %vm329, %v696, %v697
        %v700 = vadd.f32 %v690, %v698
        %s701 = sld [smem:[#allocation4 + $0x48]]
        %v702 = vstv %s701
        %v703 = vmul.f32 %v304, %v702
        %705 = vrot.lane.b32.xlu0 %v703, 80
        %v706 = vpop.permute.xlu0 %705
        %v707 = vrot.slane %v706, 7
        %v708 = vsel %vm340, %v707, %v706
        %v710 = vadd.f32 %v700, %v708
        %s711 = sld [smem:[#allocation4 + $0x4f]]
        %v712 = vstv %s711
        %v713 = vmul.f32 %v306, %v712
        %715 = vrot.lane.b32.xlu0 %v713, 64
        %v716 = vpop.permute.xlu0 %715
        %v717 = vrot.slane %v716, 7
        %v718 = vsel %vm351, %v717, %v716
        %v720 = vadd.f32 %v710, %v718
        %s721 = sld [smem:[#allocation4 + $0x56]]
        %v722 = vstv %s721
        %v723 = vmul.f32 %v306, %v722
        %725 = vrot.lane.b32.xlu0 %v723, 48
        %v726 = vpop.permute.xlu0 %725
        %v727 = vrot.slane %v726, 7
        %v728 = vsel %vm362, %v727, %v726
        %v730 = vadd.f32 %v720, %v728
        %s731 = sld [smem:[#allocation4 + $0x5d]]
        %v732 = vstv %s731
        %v733 = vmul.f32 %v306, %v732
        %735 = vrot.lane.b32.xlu0 %v733, 32
        %v736 = vpop.permute.xlu0 %735
        %v737 = vrot.slane %v736, 7
        %v738 = vsel %vm373, %v737, %v736
        %v740 = vadd.f32 %v730, %v738
        %742 = vrot.lane.b32.xlu0 %v740, 48
        %v743 = vpop.permute.xlu0 %742
        %v744 = vrot.slane %v743, 1
        %v745 = vsel %vm362, %v743, %v744
        %747 = vst.msk [vmem:[#allocation3 + $0x1] sm:$0x3] %vm275, %v745
        %v748 = vld [vmem:[#allocation3] sm:$0x7]
        %s749 = scalar_lea.vmem [#allocation8], 2
        %v750 = vld [vmem:[%s749] ss:$8 sm:$0x3]
        %752 = vrot.lane.b32.xlu0 %v750, 127
        %v753 = vpop.permute.xlu0 %752
        %v754 = vrot.slane %v753, 7
        %v755 = vsel %vm609, %v754, %v753
        %v757 = vmul.f32 %v748, %v755
        %759 = vrot.lane.b32.xlu0 %v757, 126
        %v760 = vpop.permute.xlu0 %759
        %v761 = vrot.slane %v760, 1
        %v762 = vsel %vm601, %v760, %v761
        %v764 = vadd.f32 %v612, %v762
        %s765 = sld [smem:[#allocation4 + $0x3]]
        %v766 = vstv %s765
        %v767 = vmul.f32 %v298, %v766
        %v768 = vadd.f32 %v767, 0.0
        %s769 = sld [smem:[#allocation4 + $0xa]]
        %v770 = vstv %s769
        %v771 = vmul.f32 %v298, %v770
        %773 = vrot.lane.b32.xlu0 %v771, 112
        %v774 = vpop.permute.xlu0 %773
        %v775 = vrot.slane %v774, 1
        %v776 = vsel %vm318, %v774, %v775
        %v778 = vadd.f32 %v768, %v776
        %s779 = sld [smem:[#allocation4 + $0x11]]
        %v780 = vstv %s779
        %v781 = vmul.f32 %v298, %v780
        %783 = vrot.lane.b32.xlu0 %v781, 96
        %v784 = vpop.permute.xlu0 %783
        %v785 = vrot.slane %v784, 1
        %v786 = vsel %vm329, %v784, %v785
        %v788 = vadd.f32 %v778, %v786
        %s789 = sld [smem:[#allocation4 + $0x18]]
        %v790 = vstv %s789
        %v791 = vmul.f32 %v299, %v790
        %793 = vrot.lane.b32.xlu0 %v791, 80
        %v794 = vpop.permute.xlu0 %793
        %v795 = vrot.slane %v794, 7
        %v796 = vsel %vm340, %v795, %v794
        %v798 = vadd.f32 %v788, %v796
        %s799 = sld [smem:[#allocation4 + $0x1f]]
        %v800 = vstv %s799
        %v801 = vmul.f32 %v301, %v800
        %803 = vrot.lane.b32.xlu0 %v801, 64
        %v804 = vpop.permute.xlu0 %803
        %v805 = vrot.slane %v804, 7
        %v806 = vsel %vm351, %v805, %v804
        %v808 = vadd.f32 %v798, %v806
        %s809 = sld [smem:[#allocation4 + $0x26]]
        %v810 = vstv %s809
        %v811 = vmul.f32 %v301, %v810
        %813 = vrot.lane.b32.xlu0 %v811, 48
        %v814 = vpop.permute.xlu0 %813
        %v815 = vrot.slane %v814, 7
        %v816 = vsel %vm362, %v815, %v814
        %v818 = vadd.f32 %v808, %v816
        %s819 = sld [smem:[#allocation4 + $0x2d]]
        %v820 = vstv %s819
        %v821 = vmul.f32 %v301, %v820
        %823 = vrot.lane.b32.xlu0 %v821, 32
        %v824 = vpop.permute.xlu0 %823
        %v825 = vrot.slane %v824, 7
        %v826 = vsel %vm373, %v825, %v824
        %v828 = vadd.f32 %v818, %v826
        %s829 = sld [smem:[#allocation4 + $0x34]]
        %v830 = vstv %s829
        %v831 = vmul.f32 %v303, %v830
        %v832 = vadd.f32 %v828, %v831
        %s833 = sld [smem:[#allocation4 + $0x3b]]
        %v834 = vstv %s833
        %v835 = vmul.f32 %v303, %v834
        %837 = vrot.lane.b32.xlu0 %v835, 112
        %v838 = vpop.permute.xlu0 %837
        %v839 = vrot.slane %v838, 1
        %v840 = vsel %vm318, %v838, %v839
        %v842 = vadd.f32 %v832, %v840
        %s843 = sld [smem:[#allocation4 + $0x42]]
        %v844 = vstv %s843
        %v845 = vmul.f32 %v303, %v844
        %847 = vrot.lane.b32.xlu0 %v845, 96
        %v848 = vpop.permute.xlu0 %847
        %v849 = vrot.slane %v848, 1
        %v850 = vsel %vm329, %v848, %v849
        %v852 = vadd.f32 %v842, %v850
        %s853 = sld [smem:[#allocation4 + $0x49]]
        %v854 = vstv %s853
        %v855 = vmul.f32 %v304, %v854
        %857 = vrot.lane.b32.xlu0 %v855, 80
        %v858 = vpop.permute.xlu0 %857
        %v859 = vrot.slane %v858, 7
        %v860 = vsel %vm340, %v859, %v858
        %v862 = vadd.f32 %v852, %v860
        %s863 = sld [smem:[#allocation4 + $0x50]]
        %v864 = vstv %s863
        %v865 = vmul.f32 %v306, %v864
        %867 = vrot.lane.b32.xlu0 %v865, 64
        %v868 = vpop.permute.xlu0 %867
        %v869 = vrot.slane %v868, 7
        %v870 = vsel %vm351, %v869, %v868
        %v872 = vadd.f32 %v862, %v870
        %s873 = sld [smem:[#allocation4 + $0x57]]
        %v874 = vstv %s873
        %v875 = vmul.f32 %v306, %v874
        %877 = vrot.lane.b32.xlu0 %v875, 48
        %v878 = vpop.permute.xlu0 %877
        %v879 = vrot.slane %v878, 7
        %v880 = vsel %vm362, %v879, %v878
        %v882 = vadd.f32 %v872, %v880
        %s883 = sld [smem:[#allocation4 + $0x5e]]
        %v884 = vstv %s883
        %v885 = vmul.f32 %v306, %v884
        %887 = vrot.lane.b32.xlu0 %v885, 32
        %v888 = vpop.permute.xlu0 %887
        %v889 = vrot.slane %v888, 7
        %v890 = vsel %vm373, %v889, %v888
        %v892 = vadd.f32 %v882, %v890
        %894 = vrot.lane.b32.xlu0 %v892, 48
        %v895 = vpop.permute.xlu0 %894
        %v896 = vrot.slane %v895, 1
        %v897 = vsel %vm362, %v895, %v896
        %899 = vst.msk [vmem:[#allocation3 + $0x1] sm:$0x3] %vm275, %v897
        %v900 = vld [vmem:[#allocation3 + $0x1] sm:$0x3]
        %s901 = scalar_lea.vmem [#allocation8], 3
        %v902 = vld [vmem:[%s901] ss:$8 sm:$0x3]
        %v903 = vmul.f32 %v900, %v902
        %905 = vrot.lane.b32.xlu0 %v903, 125
        %v906 = vpop.permute.xlu0 %905
        %v907 = vrot.slane %v906, 7
        %v908 = vsel %vm454, %v907, %v906
        %v910 = vadd.f32 %v764, %v908
        %s911 = sld [smem:[#allocation4 + $0x4]]
        %v912 = vstv %s911
        %v913 = vmul.f32 %v298, %v912
        %v914 = vadd.f32 %v913, 0.0
        %s915 = sld [smem:[#allocation4 + $0xb]]
        %v916 = vstv %s915
        %v917 = vmul.f32 %v298, %v916
        %919 = vrot.lane.b32.xlu0 %v917, 112
        %v920 = vpop.permute.xlu0 %919
        %v921 = vrot.slane %v920, 1
        %v922 = vsel %vm318, %v920, %v921
        %v924 = vadd.f32 %v914, %v922
        %s925 = sld [smem:[#allocation4 + $0x12]]
        %v926 = vstv %s925
        %v927 = vmul.f32 %v298, %v926
        %929 = vrot.lane.b32.xlu0 %v927, 96
        %v930 = vpop.permute.xlu0 %929
        %v931 = vrot.slane %v930, 1
        %v932 = vsel %vm329, %v930, %v931
        %v934 = vadd.f32 %v924, %v932
        %s935 = sld [smem:[#allocation4 + $0x19]]
        %v936 = vstv %s935
        %v937 = vmul.f32 %v299, %v936
        %939 = vrot.lane.b32.xlu0 %v937, 80
        %v940 = vpop.permute.xlu0 %939
        %v941 = vrot.slane %v940, 7
        %v942 = vsel %vm340, %v941, %v940
        %v944 = vadd.f32 %v934, %v942
        %s945 = sld [smem:[#allocation4 + $0x20]]
        %v946 = vstv %s945
        %v947 = vmul.f32 %v301, %v946
        %949 = vrot.lane.b32.xlu0 %v947, 64
        %v950 = vpop.permute.xlu0 %949
        %v951 = vrot.slane %v950, 7
        %v952 = vsel %vm351, %v951, %v950
        %v954 = vadd.f32 %v944, %v952
        %s955 = sld [smem:[#allocation4 + $0x27]]
        %v956 = vstv %s955
        %v957 = vmul.f32 %v301, %v956
        %959 = vrot.lane.b32.xlu0 %v957, 48
        %v960 = vpop.permute.xlu0 %959
        %v961 = vrot.slane %v960, 7
        %v962 = vsel %vm362, %v961, %v960
        %v964 = vadd.f32 %v954, %v962
        %s965 = sld [smem:[#allocation4 + $0x2e]]
        %v966 = vstv %s965
        %v967 = vmul.f32 %v301, %v966
        %969 = vrot.lane.b32.xlu0 %v967, 32
        %v970 = vpop.permute.xlu0 %969
        %v971 = vrot.slane %v970, 7
        %v972 = vsel %vm373, %v971, %v970
        %v974 = vadd.f32 %v964, %v972
        %s975 = sld [smem:[#allocation4 + $0x35]]
        %v976 = vstv %s975
        %v977 = vmul.f32 %v303, %v976
        %v978 = vadd.f32 %v974, %v977
        %s979 = sld [smem:[#allocation4 + $0x3c]]
        %v980 = vstv %s979
        %v981 = vmul.f32 %v303, %v980
        %983 = vrot.lane.b32.xlu0 %v981, 112
        %v984 = vpop.permute.xlu0 %983
        %v985 = vrot.slane %v984, 1
        %v986 = vsel %vm318, %v984, %v985
        %v988 = vadd.f32 %v978, %v986
        %s989 = sld [smem:[#allocation4 + $0x43]]
        %v990 = vstv %s989
        %v991 = vmul.f32 %v303, %v990
        %993 = vrot.lane.b32.xlu0 %v991, 96
        %v994 = vpop.permute.xlu0 %993
        %v995 = vrot.slane %v994, 1
        %v996 = vsel %vm329, %v994, %v995
        %v998 = vadd.f32 %v988, %v996
        %s999 = sld [smem:[#allocation4 + $0x4a]]
        %v1000 = vstv %s999
        %v1001 = vmul.f32 %v304, %v1000
        %1003 = vrot.lane.b32.xlu0 %v1001, 80
        %v1004 = vpop.permute.xlu0 %1003
        %v1005 = vrot.slane %v1004, 7
        %v1006 = vsel %vm340, %v1005, %v1004
        %v1008 = vadd.f32 %v998, %v1006
        %s1009 = sld [smem:[#allocation4 + $0x51]]
        %v1010 = vstv %s1009
        %v1011 = vmul.f32 %v306, %v1010
        %1013 = vrot.lane.b32.xlu0 %v1011, 64
        %v1014 = vpop.permute.xlu0 %1013
        %v1015 = vrot.slane %v1014, 7
        %v1016 = vsel %vm351, %v1015, %v1014
        %v1018 = vadd.f32 %v1008, %v1016
        %s1019 = sld [smem:[#allocation4 + $0x58]]
        %v1020 = vstv %s1019
        %v1021 = vmul.f32 %v306, %v1020
        %1023 = vrot.lane.b32.xlu0 %v1021, 48
        %v1024 = vpop.permute.xlu0 %1023
        %v1025 = vrot.slane %v1024, 7
        %v1026 = vsel %vm362, %v1025, %v1024
        %v1028 = vadd.f32 %v1018, %v1026
        %s1029 = sld [smem:[#allocation4 + $0x5f]]
        %v1030 = vstv %s1029
        %v1031 = vmul.f32 %v306, %v1030
        %1033 = vrot.lane.b32.xlu0 %v1031, 32
        %v1034 = vpop.permute.xlu0 %1033
        %v1035 = vrot.slane %v1034, 7
        %v1036 = vsel %vm373, %v1035, %v1034
        %v1038 = vadd.f32 %v1028, %v1036
        %1040 = vrot.lane.b32.xlu0 %v1038, 48
        %v1041 = vpop.permute.xlu0 %1040
        %v1042 = vrot.slane %v1041, 1
        %v1043 = vsel %vm362, %v1041, %v1042
        %1045 = vst.msk [vmem:[#allocation3 + $0x1] sm:$0x3] %vm275, %v1043
        %v1046 = vld [vmem:[#allocation3 + $0x1] sm:$0x7]
        %s1047 = scalar_lea.vmem [#allocation8], 4
        %v1048 = vld [vmem:[%s1047] ss:$8 sm:$0x3]
        %1050 = vrot.lane.b32.xlu0 %v1048, 1
        %v1051 = vpop.permute.xlu0 %1050
        %v1052 = vrot.slane %v1051, 7
        %vm1053 = vcmask 7168
        %v1054 = vsel %vm1053, %v1052, %v1051
        %v1056 = vmul.f32 %v1046, %v1054
        %1058 = vrot.lane.b32.xlu0 %v1056, 124
        %v1059 = vpop.permute.xlu0 %1058
        %v1060 = vrot.slane %v1059, 7
        %vm1061 = vcmask 1014784
        %v1062 = vsel %vm1061, %v1060, %v1059
        %v1064 = vadd.f32 %v910, %v1062
        %s1065 = sld [smem:[#allocation4 + $0x5]]
        %v1066 = vstv %s1065
        %v1067 = vmul.f32 %v298, %v1066
        %v1068 = vadd.f32 %v1067, 0.0
        %s1069 = sld [smem:[#allocation4 + $0xc]]
        %v1070 = vstv %s1069
        %v1071 = vmul.f32 %v298, %v1070
        %1073 = vrot.lane.b32.xlu0 %v1071, 112
        %v1074 = vpop.permute.xlu0 %1073
        %v1075 = vrot.slane %v1074, 1
        %v1076 = vsel %vm318, %v1074, %v1075
        %v1078 = vadd.f32 %v1068, %v1076
        %s1079 = sld [smem:[#allocation4 + $0x13]]
        %v1080 = vstv %s1079
        %v1081 = vmul.f32 %v298, %v1080
        %1083 = vrot.lane.b32.xlu0 %v1081, 96
        %v1084 = vpop.permute.xlu0 %1083
        %v1085 = vrot.slane %v1084, 1
        %v1086 = vsel %vm329, %v1084, %v1085
        %v1088 = vadd.f32 %v1078, %v1086
        %s1089 = sld [smem:[#allocation4 + $0x1a]]
        %v1090 = vstv %s1089
        %v1091 = vmul.f32 %v299, %v1090
        %1093 = vrot.lane.b32.xlu0 %v1091, 80
        %v1094 = vpop.permute.xlu0 %1093
        %v1095 = vrot.slane %v1094, 7
        %v1096 = vsel %vm340, %v1095, %v1094
        %v1098 = vadd.f32 %v1088, %v1096
        %s1099 = sld [smem:[#allocation4 + $0x21]]
        %v1100 = vstv %s1099
        %v1101 = vmul.f32 %v301, %v1100
        %1103 = vrot.lane.b32.xlu0 %v1101, 64
        %v1104 = vpop.permute.xlu0 %1103
        %v1105 = vrot.slane %v1104, 7
        %v1106 = vsel %vm351, %v1105, %v1104
        %v1108 = vadd.f32 %v1098, %v1106
        %s1109 = sld [smem:[#allocation4 + $0x28]]
        %v1110 = vstv %s1109
        %v1111 = vmul.f32 %v301, %v1110
        %1113 = vrot.lane.b32.xlu0 %v1111, 48
        %v1114 = vpop.permute.xlu0 %1113
        %v1115 = vrot.slane %v1114, 7
        %v1116 = vsel %vm362, %v1115, %v1114
        %v1118 = vadd.f32 %v1108, %v1116
        %s1119 = sld [smem:[#allocation4 + $0x2f]]
        %v1120 = vstv %s1119
        %v1121 = vmul.f32 %v301, %v1120
        %1123 = vrot.lane.b32.xlu0 %v1121, 32
        %v1124 = vpop.permute.xlu0 %1123
        %v1125 = vrot.slane %v1124, 7
        %v1126 = vsel %vm373, %v1125, %v1124
        %v1128 = vadd.f32 %v1118, %v1126
        %s1129 = sld [smem:[#allocation4 + $0x36]]
        %v1130 = vstv %s1129
        %v1131 = vmul.f32 %v303, %v1130
        %v1132 = vadd.f32 %v1128, %v1131
        %s1133 = sld [smem:[#allocation4 + $0x3d]]
        %v1134 = vstv %s1133
        %v1135 = vmul.f32 %v303, %v1134
        %1137 = vrot.lane.b32.xlu0 %v1135, 112
        %v1138 = vpop.permute.xlu0 %1137
        %v1139 = vrot.slane %v1138, 1
        %v1140 = vsel %vm318, %v1138, %v1139
        %v1142 = vadd.f32 %v1132, %v1140
        %s1143 = sld [smem:[#allocation4 + $0x44]]
        %v1144 = vstv %s1143
        %v1145 = vmul.f32 %v303, %v1144
        %1147 = vrot.lane.b32.xlu0 %v1145, 96
        %v1148 = vpop.permute.xlu0 %1147
        %v1149 = vrot.slane %v1148, 1
        %v1150 = vsel %vm329, %v1148, %v1149
        %v1152 = vadd.f32 %v1142, %v1150
        %s1153 = sld [smem:[#allocation4 + $0x4b]]
        %v1154 = vstv %s1153
        %v1155 = vmul.f32 %v304, %v1154
        %1157 = vrot.lane.b32.xlu0 %v1155, 80
        %v1158 = vpop.permute.xlu0 %1157
        %v1159 = vrot.slane %v1158, 7
        %v1160 = vsel %vm340, %v1159, %v1158
        %v1162 = vadd.f32 %v1152, %v1160
        %s1163 = sld [smem:[#allocation4 + $0x52]]
        %v1164 = vstv %s1163
        %v1165 = vmul.f32 %v306, %v1164
        %1167 = vrot.lane.b32.xlu0 %v1165, 64
        %v1168 = vpop.permute.xlu0 %1167
        %v1169 = vrot.slane %v1168, 7
        %v1170 = vsel %vm351, %v1169, %v1168
        %v1172 = vadd.f32 %v1162, %v1170
        %s1173 = sld [smem:[#allocation4 + $0x59]]
        %v1174 = vstv %s1173
        %v1175 = vmul.f32 %v306, %v1174
        %1177 = vrot.lane.b32.xlu0 %v1175, 48
        %v1178 = vpop.permute.xlu0 %1177
        %v1179 = vrot.slane %v1178, 7
        %v1180 = vsel %vm362, %v1179, %v1178
        %v1182 = vadd.f32 %v1172, %v1180
        %s1183 = sld [smem:[#allocation4 + $0x60]]
        %v1184 = vstv %s1183
        %v1185 = vmul.f32 %v306, %v1184
        %1187 = vrot.lane.b32.xlu0 %v1185, 32
        %v1188 = vpop.permute.xlu0 %1187
        %v1189 = vrot.slane %v1188, 7
        %v1190 = vsel %vm373, %v1189, %v1188
        %v1192 = vadd.f32 %v1182, %v1190
        %1194 = vrot.lane.b32.xlu0 %v1192, 48
        %v1195 = vpop.permute.xlu0 %1194
        %v1196 = vrot.slane %v1195, 1
        %v1197 = vsel %vm362, %v1195, %v1196
        %1199 = vst.msk [vmem:[#allocation3 + $0x1] sm:$0x3] %vm275, %v1197
        %v1200 = vld [vmem:[#allocation3 + $0x1] sm:$0x7]
        %s1201 = scalar_lea.vmem [#allocation8], 5
        %v1202 = vld [vmem:[%s1201] ss:$8 sm:$0x3]
        %1204 = vrot.lane.b32.xlu0 %v1202, 2
        %v1205 = vpop.permute.xlu0 %1204
        %v1206 = vrot.slane %v1205, 7
        %vm1207 = vcmask 15360
        %v1208 = vsel %vm1207, %v1206, %v1205
        %v1210 = vmul.f32 %v1200, %v1208
        %1212 = vrot.lane.b32.xlu0 %v1210, 123
        %v1213 = vpop.permute.xlu0 %1212
        %v1214 = vrot.slane %v1213, 7
        %vm1215 = vcmask 1006592
        %v1216 = vsel %vm1215, %v1214, %v1213
        %v1218 = vadd.f32 %v1064, %v1216
        %s1219 = sld [smem:[#allocation4 + $0x6]]
        %v1220 = vstv %s1219
        %v1221 = vmul.f32 %v298, %v1220
        %v1222 = vadd.f32 %v1221, 0.0
        %s1223 = sld [smem:[#allocation4 + $0xd]]
        %v1224 = vstv %s1223
        %v1225 = vmul.f32 %v298, %v1224
        %1227 = vrot.lane.b32.xlu0 %v1225, 112
        %v1228 = vpop.permute.xlu0 %1227
        %v1229 = vrot.slane %v1228, 1
        %v1230 = vsel %vm318, %v1228, %v1229
        %v1232 = vadd.f32 %v1222, %v1230
        %s1233 = sld [smem:[#allocation4 + $0x14]]
        %v1234 = vstv %s1233
        %v1235 = vmul.f32 %v298, %v1234
        %1237 = vrot.lane.b32.xlu0 %v1235, 96
        %v1238 = vpop.permute.xlu0 %1237
        %v1239 = vrot.slane %v1238, 1
        %v1240 = vsel %vm329, %v1238, %v1239
        %v1242 = vadd.f32 %v1232, %v1240
        %s1243 = sld [smem:[#allocation4 + $0x1b]]
        %v1244 = vstv %s1243
        %v1245 = vmul.f32 %v299, %v1244
        %1247 = vrot.lane.b32.xlu0 %v1245, 80
        %v1248 = vpop.permute.xlu0 %1247
        %v1249 = vrot.slane %v1248, 7
        %v1250 = vsel %vm340, %v1249, %v1248
        %v1252 = vadd.f32 %v1242, %v1250
        %s1253 = sld [smem:[#allocation4 + $0x22]]
        %v1254 = vstv %s1253
        %v1255 = vmul.f32 %v301, %v1254
        %1257 = vrot.lane.b32.xlu0 %v1255, 64
        %v1258 = vpop.permute.xlu0 %1257
        %v1259 = vrot.slane %v1258, 7
        %v1260 = vsel %vm351, %v1259, %v1258
        %v1262 = vadd.f32 %v1252, %v1260
        %s1263 = sld [smem:[#allocation4 + $0x29]]
        %v1264 = vstv %s1263
        %v1265 = vmul.f32 %v301, %v1264
        %1267 = vrot.lane.b32.xlu0 %v1265, 48
        %v1268 = vpop.permute.xlu0 %1267
        %v1269 = vrot.slane %v1268, 7
        %v1270 = vsel %vm362, %v1269, %v1268
        %v1272 = vadd.f32 %v1262, %v1270
        %s1273 = sld [smem:[#allocation4 + $0x30]]
        %v1274 = vstv %s1273
        %v1275 = vmul.f32 %v301, %v1274
        %1277 = vrot.lane.b32.xlu0 %v1275, 32
        %v1278 = vpop.permute.xlu0 %1277
        %v1279 = vrot.slane %v1278, 7
        %v1280 = vsel %vm373, %v1279, %v1278
        %v1282 = vadd.f32 %v1272, %v1280
        %s1283 = sld [smem:[#allocation4 + $0x37]]
        %v1284 = vstv %s1283
        %v1285 = vmul.f32 %v303, %v1284
        %v1286 = vadd.f32 %v1282, %v1285
        %s1287 = sld [smem:[#allocation4 + $0x3e]]
        %v1288 = vstv %s1287
        %v1289 = vmul.f32 %v303, %v1288
        %1291 = vrot.lane.b32.xlu0 %v1289, 112
        %v1292 = vpop.permute.xlu0 %1291
        %v1293 = vrot.slane %v1292, 1
        %v1294 = vsel %vm318, %v1292, %v1293
        %v1296 = vadd.f32 %v1286, %v1294
        %s1297 = sld [smem:[#allocation4 + $0x45]]
        %v1298 = vstv %s1297
        %v1299 = vmul.f32 %v303, %v1298
        %1301 = vrot.lane.b32.xlu0 %v1299, 96
        %v1302 = vpop.permute.xlu0 %1301
        %v1303 = vrot.slane %v1302, 1
        %v1304 = vsel %vm329, %v1302, %v1303
        %v1306 = vadd.f32 %v1296, %v1304
        %s1307 = sld [smem:[#allocation4 + $0x4c]]
        %v1308 = vstv %s1307
        %v1309 = vmul.f32 %v304, %v1308
        %1311 = vrot.lane.b32.xlu0 %v1309, 80
        %v1312 = vpop.permute.xlu0 %1311
        %v1313 = vrot.slane %v1312, 7
        %v1314 = vsel %vm340, %v1313, %v1312
        %v1316 = vadd.f32 %v1306, %v1314
        %s1317 = sld [smem:[#allocation4 + $0x53]]
        %v1318 = vstv %s1317
        %v1319 = vmul.f32 %v306, %v1318
        %1321 = vrot.lane.b32.xlu0 %v1319, 64
        %v1322 = vpop.permute.xlu0 %1321
        %v1323 = vrot.slane %v1322, 7
        %v1324 = vsel %vm351, %v1323, %v1322
        %v1326 = vadd.f32 %v1316, %v1324
        %s1327 = sld [smem:[#allocation4 + $0x5a]]
        %v1328 = vstv %s1327
        %v1329 = vmul.f32 %v306, %v1328
        %1331 = vrot.lane.b32.xlu0 %v1329, 48
        %v1332 = vpop.permute.xlu0 %1331
        %v1333 = vrot.slane %v1332, 7
        %v1334 = vsel %vm362, %v1333, %v1332
        %v1336 = vadd.f32 %v1326, %v1334
        %s1337 = sld [smem:[#allocation4 + $0x61]]
        %v1338 = vstv %s1337
        %v1339 = vmul.f32 %v306, %v1338
        %1341 = vrot.lane.b32.xlu0 %v1339, 32
        %v1342 = vpop.permute.xlu0 %1341
        %v1343 = vrot.slane %v1342, 7
        %v1344 = vsel %vm373, %v1343, %v1342
        %v1346 = vadd.f32 %v1336, %v1344
        %1348 = vrot.lane.b32.xlu0 %v1346, 48
        %v1349 = vpop.permute.xlu0 %1348
        %v1350 = vrot.slane %v1349, 1
        %v1351 = vsel %vm362, %v1349, %v1350
        %1353 = vst.msk [vmem:[#allocation3 + $0x1] sm:$0x3] %vm275, %v1351
        %v1354 = vld [vmem:[#allocation3 + $0x1] sm:$0x7]
        %s1355 = scalar_lea.vmem [#allocation8], 6
        %v1356 = vld [vmem:[%s1355] ss:$8 sm:$0x3]
        %1358 = vrot.lane.b32.xlu0 %v1356, 3
        %v1359 = vpop.permute.xlu0 %1358
        %v1360 = vrot.slane %v1359, 7
        %vm1361 = vcmask 23552
        %v1362 = vsel %vm1361, %v1360, %v1359
        %v1364 = vmul.f32 %v1354, %v1362
        %1366 = vrot.lane.b32.xlu0 %v1364, 122
        %v1367 = vpop.permute.xlu0 %1366
        %v1368 = vrot.slane %v1367, 7
        %vm1369 = vcmask 998400
        %v1370 = vsel %vm1369, %v1368, %v1367
        %v1372 = vadd.f32 %v1218, %v1370
        %v1373 = vxor.u32 %v1372, 2147483648
        %v1374 = vmul.f32 %v1373, 1.442695
        %v1375 = vpow.pop %v1374
        %v1376 = vadd.f32 %v1375, 1.0
        %v1377 = vrcp.pop %v1376
        %v1378 = vmul.f32 1.0, %v1377
        %v1379 = vld [vmem:[%s188] sm:$0xff]
        %v1381 = vlaneseq
        %v1382 = vshrl.u32 %v1381, 7
        %v1383 = vsub.s32 0, %v1382
        %v1384 = vrot.slane %v1378, %v1383
        %v1385 = vlaneseq
        %v1386 = vshrl.u32 %v1385, 7
        %v1387 = vsub.s32 1, %v1386
        %v1388 = vrot.slane %v1378, %v1387
        %v1389 = vlaneseq
        %v1390 = vshrl.u32 %v1389, 7
        %v1391 = vsub.s32 2, %v1390
        %v1392 = vrot.slane %v1378, %v1391
        %v1393 = vcombine.low %v1384, %v1388
        %1394 = vrot.lane.b32.xlu0 %v1393, 3
        %v1395 = vpop.permute.xlu0 %1394
        %1396 = vrot.lane.b32.xlu0 %v1392, 3
        %v1397 = vpop.permute.xlu0 %1396
        %v1398 = vrot.slane %v1395, 4
        %v1399 = vrot.slane %v1397, 4
        %v1400 = vsel %vm216, %v1398, %v1399
        %v1401 = vsel %vm1361, %v1395, %v1400
        %v1403 = vmul.f32 %v1379, %v1401
        %1404 = vst [vmem:[%s211] sm:$0xff] %v1403
        %s1405 = sand.u32 %s98, 1
        %s1406 = scalar_lea.sflag [#allocation6], %s1405
        %s1407 = sand.u32 %s98, 1
        %s1408 = smul.addr %s1407, 8
        %s1409 = scalar_lea.vmem [#allocation11], %s1408
        // Predicated region
        $region45: #{tpu_custom_call.1} parent=31 // pred_check
          %p1410 = pneg %p108
        $region46: #{tpu_custom_call.1} parent=31 // pred_check_branch
          %1412 = sbr.rel (%p1410) target = $region48
        $region47: #{tpu_custom_call.1} parent=31 // pred_region
          %s1414 = ssub.s32 128, 128
          %1415 = vsyncadd %s1406, %s1414
          %s1416 = smul.addr %s22, 2
          %s1417 = smul.addr %s1416, 64
          %s1418 = scalar_lea.hbm %s3, %s1417
          %s1420 = sshll.u32 %s1409, 4
          %s1421 = int_to_ptr.vmem [resolvable:$true] %s1420
          %1423 = dma.vmem_to_hbm [thread:$0]  %s1421, 128, %s1418, %s1406
        $region48: #{tpu_custom_call.1} parent=31 // pred_fallthru
          _
      $region32: #{tpu_custom_call.1} parent=5 // pred_fallthru
        _
      %p1424 = scmp.le.s32.totalorder 2, %s17
      // Predicated region
      $region49: #{tpu_custom_call.1} parent=5 // pred_check
        %p1425 = pneg %p1424
      $region50: #{tpu_custom_call.1} parent=5 // pred_check_branch
        %1427 = sbr.rel (%p1425) target = $region52
      $region51: #{tpu_custom_call.1} parent=5 // pred_region
        %s1428 = ssub.s32 %s17, 2
        // Predicated region
        $region53: #{tpu_custom_call.1} parent=51 // pred_check
          %p1429 = pneg %p114
        $region54: #{tpu_custom_call.1} parent=51 // pred_check_branch
          %1431 = sbr.rel (%p1429) target = $region56
        $region55: #{tpu_custom_call.1} parent=51 // pred_region
          %s1432 = sand.u32 %s99, 1
          %s1433 = scalar_lea.sflag [#allocation6], %s1432
          %s1434 = sand.u32 %s99, 1
          %s1435 = smul.addr %s1434, 8
          %s1436 = scalar_lea.vmem [#allocation11], %s1435
          %1437 = dma.done %s1433, 128
        $region56: #{tpu_custom_call.1} parent=51 // pred_fallthru
          _
      $region52: #{tpu_custom_call.1} parent=5 // pred_fallthru
        _
    $region6: #{tpu_custom_call.1} parent=1 // loop_footer
      %s21 = sadd.s32 1, %s17
    $region7: #{tpu_custom_call.1} parent=1 // loop_footer_branch
      %16 = sbr.rel target = $region3
    $region8: #{tpu_custom_call.1} parent=1 // loop_exit
      _
    %1438 = vsyncpa [#allocation5], 1
    %s1439 = scalar_lea.sflag [#allocation5], 1
    %1440 = vsyncpa %s1439, 1
    %1441 = vsyncpa [#allocation10], 1
    %s1442 = scalar_lea.sflag [#allocation10], 1
    %1443 = vsyncpa %s1442, 1
    %1444 = vsyncpa [#allocation6], 1
    %s1445 = scalar_lea.sflag [#allocation6], 1
    %1446 = vsyncpa %s1445, 1
    %1447 = vsyncpa [#allocation7], 1
    %s1448 = scalar_lea.sflag [#allocation7], 1
    %1449 = vsyncpa %s1448, 1

</llo_original>
